<compile_context>
chip_gen: v6e
topology: v6e:2x2x1
jax: 0.10.0
libtpu: 0.0.40
codegen_flags: <defaults>
</compile_context>

<pallas_src>
import functools

import numpy as np
import jax
import jax.numpy as jnp
from jax.experimental import pallas as pl
from jax.experimental.pallas import tpu as pltpu


# ----------------------------------------------------------------------------
# Reference helper (numpy) matching the PyTorch module's sinusoid table.
# ----------------------------------------------------------------------------
def get_sinusoid_encoding_table(n_seq, d_hidn):
    pos = np.arange(n_seq)[:, None].astype(np.float64)
    i = np.arange(d_hidn)[None, :].astype(np.float64)
    angle = pos / np.power(10000.0, 2.0 * np.floor(i / 2.0) / d_hidn)
    table = np.array(angle)
    table[:, 0::2] = np.sin(angle[:, 0::2])
    table[:, 1::2] = np.cos(angle[:, 1::2])
    return table.astype(np.float32)


# ----------------------------------------------------------------------------
# Generation-aware sizing helpers.
# ----------------------------------------------------------------------------
@functools.lru_cache(maxsize=1)
def _tpu_vmem_capacity_bytes():
    try:
        return int(pltpu.get_tpu_info().vmem_capacity_bytes)
    except Exception:
        return 64 * 1024 * 1024          # conservative fallback (v7x size)


def _vmem_limit_bytes():
    # ~3/4 of the physical per-core VMEM, capped at 96 MiB.
    return int(min(_tpu_vmem_capacity_bytes() * 3 // 4, 96 * 1024 * 1024))


def _q_tile_cap():
    # 128 MiB parts (v5e/v6e) can afford larger query tiles than v7x (64 MiB).
    return 512 if _tpu_vmem_capacity_bytes() >= 96 * 1024 * 1024 else 256


def _pick_tile(n, cap):
    """Largest power-of-two tile <= cap that divides n (or n itself)."""
    if n <= cap:
        return n
    t = cap
    while t >= 8:
        if n % t == 0:
            return t
        t //= 2
    return n


def _layer_norm(y, eps):
    # Fresh Keras LayerNormalization(eps): gamma=1, beta=0 (matches the module).
    mu = jnp.mean(y, axis=-1, keepdims=True)
    var = jnp.mean((y - mu) ** 2, axis=-1, keepdims=True)
    return (y - mu) * jax.lax.rsqrt(var + eps)


# ----------------------------------------------------------------------------
# Pallas kernel 1: multi-head attention core + output projection + res + LN1.
# Grid = (batch, query_tile); all heads processed per grid step.
# ----------------------------------------------------------------------------
def attention_kernel(x_ref, q_ref, k_ref, v_ref, mask_ref, wo_ref, bo_ref,
                     out_ref, *maybe_attn, n_head, eps, collect_attn):
    attn_ref = maybe_attn[0] if collect_attn else None

    x = x_ref[0]                        # (tq, D) f32 residual path
    mask_add = mask_ref[0]              # (1, S) f32 additive pad mask (-1e9 on pads)

    ctx_heads = []
    for h in range(n_head):             # static unroll; scores/softmax stay f32
        qh = q_ref[0, h]                # (tq, Dh) bf16, 1/sqrt(Dh) already folded in
        kh = k_ref[0, h]                # (S, Dh)  bf16
        vh = v_ref[0, h]                # (S, Dh)  bf16
        scores = jax.lax.dot_general(qh, kh, (((1,), (1,)), ((), ())),
                                     preferred_element_type=jnp.float32)
        scores = scores + mask_add      # masked_fill_(attn_mask, -1e9) equivalent
        s_max = jnp.max(scores, axis=-1, keepdims=True)
        e = jnp.exp(scores - s_max)
        inv = 1.0 / jnp.sum(e, axis=-1, keepdims=True)   # exact recip, (tq,1) only
        probs = e * inv
        if collect_attn:
            attn_ref[0, h] = probs.astype(attn_ref.dtype)
        ctx_heads.append(jnp.dot(probs.astype(jnp.bfloat16), vh,
                                 preferred_element_type=jnp.float32))

    # Concatenate heads -> single H*Dh-wide output-projection matmul on the MXU.
    ctx = jnp.concatenate(ctx_heads, axis=-1).astype(jnp.bfloat16)   # (tq, H*Dh)
    att = jnp.dot(ctx, wo_ref[...], preferred_element_type=jnp.float32) + bo_ref[...]

    out_ref[0] = _layer_norm(x + att, eps).astype(out_ref.dtype)


def attention_layer(x, q, k, v, mask_add, wo, bo, *, q_tile, eps,
                    collect_attn, attn_dtype):
    B, S, D = x.shape
    H, Dh = q.shape[1], q.shape[3]
    n_qt = S // q_tile

    kernel = functools.partial(attention_kernel, n_head=H, eps=eps,
                               collect_attn=collect_attn)

    # TODO(synk): pipeline_mode=pl.Buffered(1) on the constant-index weight
    # blocks and a flash-style inner loop over S chunks would further cut VMEM
    # at very long sequence lengths (relevant for v7x's 64 MiB VMEM).
    in_specs = [
        pl.BlockSpec((1, q_tile, D), lambda b, qi: (b, qi, 0)),         # residual x
        pl.BlockSpec((1, H, q_tile, Dh), lambda b, qi: (b, 0, qi, 0)),  # Q (scaled)
        pl.BlockSpec((1, H, S, Dh), lambda b, qi: (b, 0, 0, 0)),        # K
        pl.BlockSpec((1, H, S, Dh), lambda b, qi: (b, 0, 0, 0)),        # V
        pl.BlockSpec((1, 1, S), lambda b, qi: (b, 0, 0)),               # additive mask
        pl.BlockSpec((H * Dh, D), lambda b, qi: (0, 0)),                # W_O
        pl.BlockSpec((1, D), lambda b, qi: (0, 0)),                     # b_O
    ]
    out_specs = [pl.BlockSpec((1, q_tile, D), lambda b, qi: (b, qi, 0))]
    out_shape = [jax.ShapeDtypeStruct((B, S, D), jnp.float32)]
    if collect_attn:
        out_specs.append(pl.BlockSpec((1, H, q_tile, S), lambda b, qi: (b, 0, qi, 0)))
        out_shape.append(jax.ShapeDtypeStruct((B, H, S, S), attn_dtype))

    outs = pl.pallas_call(
        kernel,
        grid=(B, n_qt),
        in_specs=in_specs,
        out_specs=out_specs,
        out_shape=out_shape,
        compiler_params=pltpu.CompilerParams(
            dimension_semantics=("parallel", "parallel"),
            vmem_limit_bytes=_vmem_limit_bytes()),
    )(x, q, k, v, mask_add, wo, bo)
    if collect_attn:
        return outs[0], outs[1]
    return outs[0], None


# ----------------------------------------------------------------------------
# Pallas kernel 2: position-wise FFN (Conv1d k=1 == matmul) + residual + LN2.
# Runs on the flattened (B*S, D) activation with a lane-dense row tile.
# ----------------------------------------------------------------------------
def ffn_kernel(h_ref, w1_ref, b1_ref, w2_ref, b2_ref, out_ref, *, eps):
    h = h_ref[...]                      # (tr, D) f32 (residual path)
    f = jnp.dot(h.astype(jnp.bfloat16), w1_ref[...],
                preferred_element_type=jnp.float32) + b1_ref[...]
    f = jax.nn.gelu(f, approximate=True)    # tanh GELU -> EUP (perf review)
    f = jnp.dot(f.astype(jnp.bfloat16), w2_ref[...],
                preferred_element_type=jnp.float32) + b2_ref[...]
    out_ref[...] = _layer_norm(f + h, eps).astype(out_ref.dtype)


def ffn_layer(h, w1, b1, w2, b2, *, eps):
    B, S, D = h.shape
    d_ff = w1.shape[1]
    rows = B * S
    tr = _pick_tile(rows, 512)
    hf = h.reshape(rows, D)
    out = pl.pallas_call(
        functools.partial(ffn_kernel, eps=eps),
        grid=(rows // tr,),
        in_specs=[
            pl.BlockSpec((tr, D), lambda i: (i, 0)),
            pl.BlockSpec((D, d_ff), lambda i: (0, 0)),
            pl.BlockSpec((1, d_ff), lambda i: (0, 0)),
            pl.BlockSpec((d_ff, D), lambda i: (0, 0)),
            pl.BlockSpec((1, D), lambda i: (0, 0)),
        ],
        out_specs=pl.BlockSpec((tr, D), lambda i: (i, 0)),
        out_shape=jax.ShapeDtypeStruct((rows, D), jnp.float32),
        compiler_params=pltpu.CompilerParams(
            dimension_semantics=("parallel",),
            vmem_limit_bytes=_vmem_limit_bytes()),
    )(hf, w1, b1, w2, b2)
    return out.reshape(B, S, D)


# ----------------------------------------------------------------------------
# One-time host-side parameter preprocessing (hoisted out of the forward).
# ----------------------------------------------------------------------------
def preprocess_params(layer_params, *, n_head, d_head):
    """Fold 1/sqrt(d_head) into W_Q/b_Q, pack Q/K/V into one (D, 3*H*Dh) bf16
    matrix, cast matmul weights to bf16, and stack across layers for lax.scan."""
    scale = 1.0 / (d_head ** 0.5)

    def prep(p):
        wqkv = jnp.concatenate([p['wq'] * scale, p['wk'], p['wv']], axis=1)
        bqkv = jnp.concatenate([p['bq'][0] * scale, p['bk'][0], p['bv'][0]], axis=0)
        return {
            'wqkv': wqkv.astype(jnp.bfloat16),
            'bqkv': bqkv.astype(jnp.float32),
            'wo': p['wo'].astype(jnp.bfloat16),
            'bo': p['bo'].astype(jnp.float32),
            'w1': p['w1'].astype(jnp.bfloat16),
            'b1': p['b1'].astype(jnp.float32),
            'w2': p['w2'].astype(jnp.bfloat16),
            'b2': p['b2'].astype(jnp.float32),
        }

    preps = [prep(p) for p in layer_params]
    return {k: jnp.stack([pp[k] for pp in preps]) for k in preps[0]}


# ----------------------------------------------------------------------------
# EncoderLoop forward: embedding glue in XLA; per-layer hot path in Pallas.
# ----------------------------------------------------------------------------
def build_encoder_forward(*, i_pad, n_head, d_head, eps=1e-6,
                          collect_attn=False, attn_dtype=jnp.bfloat16):
    @jax.jit
    def forward(tokens, emb_table, pos_table, stacked):
        B, S = tokens.shape

        # Token + sinusoid positional embedding (1-based positions, pads -> 0).
        pos = jnp.broadcast_to(jnp.arange(1, S + 1, dtype=tokens.dtype), (B, S))
        pos = jnp.where(tokens == i_pad, 0, pos)
        x = emb_table[tokens] + pos_table[pos]

        # get_attn_pad_mask depends only on key positions -> additive (B,1,S) mask.
        mask_add = jnp.where(tokens == i_pad, -1e9, 0.0).astype(jnp.float32)[:, None, :]

        q_tile = _pick_tile(S, _q_tile_cap())

        def layer_step(x, p):
            # Full-width QKV projection once per layer (one bf16 MXU matmul),
            # instead of per query tile / per head (perf review item #1/#2).
            qkv = jnp.einsum('bsd,de->bse', x.astype(jnp.bfloat16), p['wqkv'],
                             preferred_element_type=jnp.float32)
            qkv = (qkv + p['bqkv'][None, None, :]).astype(jnp.bfloat16)
            qkv = qkv.reshape(B, S, 3, n_head, d_head)
            q = jnp.transpose(qkv[:, :, 0], (0, 2, 1, 3))   # (B, H, S, Dh)
            k = jnp.transpose(qkv[:, :, 1], (0, 2, 1, 3))
            v = jnp.transpose(qkv[:, :, 2], (0, 2, 1, 3))

            h1, attn = attention_layer(
                x, q, k, v, mask_add, p['wo'], p['bo'],
                q_tile=q_tile, eps=eps, collect_attn=collect_attn,
                attn_dtype=attn_dtype)
            out = ffn_layer(h1, p['w1'], p['b1'], p['w2'], p['b2'], eps=eps)
            return out, (attn if collect_attn else None)

        # lax.scan over stacked layer weights -> one compiled kernel pair.
        # TODO(synk): fuse the whole layer stack into a single pallas_call with a
        # layer grid axis so the activation stays resident in VMEM across layers.
        x, attn_stack = jax.lax.scan(layer_step, x, stacked)
        return x, attn_stack

    return forward


# ----------------------------------------------------------------------------
# Deterministic parameter construction + demo.
# ----------------------------------------------------------------------------
def make_params(key, n_layer, d_hidn, n_head, d_head, d_ff):
    HD = n_head * d_head
    layer_params = []
    for _ in range(n_layer):
        ks = jax.random.split(key, 8)
        key = ks[-1]
        p = {
            'wq': 0.02 * jax.random.normal(ks[0], (d_hidn, HD), jnp.float32),
            'bq': 0.01 * jax.random.normal(ks[1], (1, HD), jnp.float32),
            'wk': 0.02 * jax.random.normal(ks[2], (d_hidn, HD), jnp.float32),
            'bk': 0.01 * jax.random.normal(ks[3], (1, HD), jnp.float32),
            'wv': 0.02 * jax.random.normal(ks[4], (d_hidn, HD), jnp.float32),
            'bv': 0.01 * jax.random.normal(ks[5], (1, HD), jnp.float32),
            'wo': 0.02 * jax.random.normal(ks[6], (HD, d_hidn), jnp.float32),
            'bo': jnp.zeros((1, d_hidn), jnp.float32),
            'w1': 0.02 * jax.random.normal(jax.random.fold_in(ks[6], 1),
                                           (d_hidn, d_ff), jnp.float32),
            'b1': jnp.zeros((1, d_ff), jnp.float32),
            'w2': 0.02 * jax.random.normal(jax.random.fold_in(ks[6], 2),
                                           (d_ff, d_hidn), jnp.float32),
            'b2': jnp.zeros((1, d_hidn), jnp.float32),
        }
        layer_params.append(p)
    return layer_params


if __name__ == "__main__":
    # Small config consistent with the module (d_hidn = n_head * d_head).
    n_vocab, n_seq, d_hidn = 101, 8, 32
    n_head, d_head, d_ff = 4, 8, 64
    n_layer, i_pad, B = 2, 0, 2

    key = jax.random.PRNGKey(0)
    k_emb, k_tok, k_par = jax.random.split(key, 3)

    emb_table = jax.random.normal(k_emb, (n_vocab, d_hidn), jnp.float32)
    pos_table = jnp.asarray(get_sinusoid_encoding_table(n_seq + 1, d_hidn))
    layer_params = make_params(k_par, n_layer, d_hidn, n_head, d_head, d_ff)
    stacked = preprocess_params(layer_params, n_head=n_head, d_head=d_head)

    tokens = jax.random.randint(k_tok, (B, n_seq), 1, n_vocab, dtype=jnp.int32)
    tokens = tokens.at[:, -2:].set(i_pad)        # some padding positions

    forward = build_encoder_forward(i_pad=i_pad, n_head=n_head, d_head=d_head,
                                    collect_attn=True)
    outputs, attn_stack = forward(tokens, emb_table, pos_table, stacked)
    outputs = jax.block_until_ready(outputs)
    attn_stack = jax.block_until_ready(attn_stack)

    attn_probs = [attn_stack[i] for i in range(n_layer)]

    assert outputs.shape == (B, n_seq, d_hidn)
    assert len(attn_probs) == n_layer
    assert attn_probs[0].shape == (B, n_head, n_seq, n_seq)
    assert bool(jnp.all(jnp.isfinite(outputs)))
    assert bool(jnp.all(jnp.isfinite(attn_probs[0].astype(jnp.float32))))
    print("KERNEL_OK")
</pallas_src>

<mosaic_0001>
module attributes {stable_mosaic.version = 11 : i64} {
  func.func @attention_kernel(%arg0: i32, %arg1: i32, %arg2: memref<1x8x32xf32, #tpu.memory_space<vmem>>, %arg3: memref<1x4x8x8xbf16, #tpu.memory_space<vmem>>, %arg4: memref<1x4x8x8xbf16, #tpu.memory_space<vmem>>, %arg5: memref<1x4x8x8xbf16, #tpu.memory_space<vmem>>, %arg6: memref<1x1x8xf32, #tpu.memory_space<vmem>>, %arg7: memref<32x32xbf16, #tpu.memory_space<vmem>>, %arg8: memref<1x32xf32, #tpu.memory_space<vmem>>, %arg9: memref<1x8x32xf32, #tpu.memory_space<vmem>>, %arg10: memref<1x4x8x8xbf16, #tpu.memory_space<vmem>>) attributes {dimension_semantics = [#tpu.dimension_semantics<parallel>, #tpu.dimension_semantics<parallel>], iteration_bounds = array<i64: 2, 1>, scalar_prefetch = 0 : i64, scratch_operands = 0 : i64, tpu.core_type = #tpu.core_type<tc>, window_params = [{transform_indices = @transform_0, window_bounds = array<i64: 1, 8, 32>}, {transform_indices = @transform_1, window_bounds = array<i64: 1, 4, 8, 8>}, {transform_indices = @transform_2, window_bounds = array<i64: 1, 4, 8, 8>}, {transform_indices = @transform_3, window_bounds = array<i64: 1, 4, 8, 8>}, {transform_indices = @transform_4, window_bounds = array<i64: 1, 1, 8>}, {pipeline_mode = #tpu.pipeline_mode<synchronous>, transform_indices = @transform_5, window_bounds = array<i64: 32, 32>}, {pipeline_mode = #tpu.pipeline_mode<synchronous>, transform_indices = @transform_6, window_bounds = array<i64: 1, 32>}, {transform_indices = @transform_7, window_bounds = array<i64: 1, 8, 32>}, {transform_indices = @transform_8, window_bounds = array<i64: 1, 4, 8, 8>}]} {
    %c0 = arith.constant 0 : index
    %c0_0 = arith.constant 0 : index
    %c0_1 = arith.constant 0 : index
    %0 = vector.load %arg2[%c0, %c0_0, %c0_1] : memref<1x8x32xf32, #tpu.memory_space<vmem>>, vector<1x8x32xf32>
    %1 = vector.shape_cast %0 : vector<1x8x32xf32> to vector<8x32xf32>
    %c0_2 = arith.constant 0 : index
    %c0_3 = arith.constant 0 : index
    %c0_4 = arith.constant 0 : index
    %2 = vector.load %arg6[%c0_2, %c0_3, %c0_4] : memref<1x1x8xf32, #tpu.memory_space<vmem>>, vector<1x1x8xf32>
    %3 = vector.shape_cast %2 : vector<1x1x8xf32> to vector<1x8xf32>
    %c0_5 = arith.constant 0 : index
    %c0_6 = arith.constant 0 : index
    %c0_7 = arith.constant 0 : index
    %c0_8 = arith.constant 0 : index
    %4 = vector.load %arg3[%c0_5, %c0_6, %c0_7, %c0_8] : memref<1x4x8x8xbf16, #tpu.memory_space<vmem>>, vector<1x1x8x8xbf16>
    %5 = vector.shape_cast %4 : vector<1x1x8x8xbf16> to vector<8x8xbf16>
    %c0_9 = arith.constant 0 : index
    %c0_10 = arith.constant 0 : index
    %c0_11 = arith.constant 0 : index
    %c0_12 = arith.constant 0 : index
    %6 = vector.load %arg4[%c0_9, %c0_10, %c0_11, %c0_12] : memref<1x4x8x8xbf16, #tpu.memory_space<vmem>>, vector<1x1x8x8xbf16>
    %7 = vector.shape_cast %6 : vector<1x1x8x8xbf16> to vector<8x8xbf16>
    %c0_13 = arith.constant 0 : index
    %c0_14 = arith.constant 0 : index
    %c0_15 = arith.constant 0 : index
    %c0_16 = arith.constant 0 : index
    %8 = vector.load %arg5[%c0_13, %c0_14, %c0_15, %c0_16] : memref<1x4x8x8xbf16, #tpu.memory_space<vmem>>, vector<1x1x8x8xbf16>
    %9 = vector.shape_cast %8 : vector<1x1x8x8xbf16> to vector<8x8xbf16>
    %cst = arith.constant dense<0.000000e+00> : vector<8x8xf32>
    %10 = tpu.matmul %5, %7, %cst {dimension_numbers = #tpu.dot_dimension_numbers<[1], [1], [0], [0], [0, 0, 1, 0], [], []>} : vector<8x8xbf16>, vector<8x8xbf16>, vector<8x8xf32> -> vector<8x8xf32>
    %11 = vector.broadcast %3 : vector<1x8xf32> to vector<8x8xf32>
    %12 = arith.addf %10, %11 : vector<8x8xf32>
    %cst_17 = arith.constant dense<0xFF800000> : vector<8xf32>
    %13 = vector.multi_reduction <maximumf>, %12, %cst_17 [1] : vector<8x8xf32> to vector<8xf32>
    %14 = vector.shape_cast %13 : vector<8xf32> to vector<8x1xf32>
    %15 = vector.broadcast %14 : vector<8x1xf32> to vector<8x8xf32>
    %16 = arith.subf %12, %15 : vector<8x8xf32>
    %17 = math.exp %16 : vector<8x8xf32>
    %cst_18 = arith.constant dense<0.000000e+00> : vector<8xf32>
    %18 = vector.multi_reduction <add>, %17, %cst_18 [1] : vector<8x8xf32> to vector<8xf32>
    %19 = vector.shape_cast %18 : vector<8xf32> to vector<8x1xf32>
    %cst_19 = arith.constant 1.000000e+00 : f32
    %20 = vector.broadcast %cst_19 : f32 to vector<8x1xf32>
    %21 = arith.divf %20, %19 : vector<8x1xf32>
    %22 = vector.broadcast %21 : vector<8x1xf32> to vector<8x8xf32>
    %23 = arith.mulf %17, %22 : vector<8x8xf32>
    %24 = arith.truncf %23 : vector<8x8xf32> to vector<8x8xbf16>
    %c0_20 = arith.constant 0 : index
    %c0_21 = arith.constant 0 : index
    %c0_22 = arith.constant 0 : index
    %c0_23 = arith.constant 0 : index
    %25 = vector.load %arg10[%c0_20, %c0_21, %c0_22, %c0_23] : memref<1x4x8x8xbf16, #tpu.memory_space<vmem>>, vector<1x1x8x8xbf16>
    %26 = vector.shape_cast %25 : vector<1x1x8x8xbf16> to vector<8x8xbf16>
    %27 = vector.shape_cast %24 : vector<8x8xbf16> to vector<1x1x8x8xbf16>
    tpu.vector_store %arg10[%c0_20, %c0_21, %c0_22, %c0_23], %27 {strides = array<i32>} : memref<1x4x8x8xbf16, #tpu.memory_space<vmem>>, vector<1x1x8x8xbf16>,
    %28 = arith.truncf %23 : vector<8x8xf32> to vector<8x8xbf16>
    %cst_24 = arith.constant dense<0.000000e+00> : vector<8x8xf32>
    %29 = tpu.matmul %28, %9, %cst_24 {dimension_numbers = #tpu.dot_dimension_numbers<[1], [0], [0], [1], [0, 0, 1, 1], [], []>} : vector<8x8xbf16>, vector<8x8xbf16>, vector<8x8xf32> -> vector<8x8xf32>
    %c0_25 = arith.constant 0 : index
    %c1 = arith.constant 1 : index
    %c0_26 = arith.constant 0 : index
    %c0_27 = arith.constant 0 : index
    %30 = vector.load %arg3[%c0_25, %c1, %c0_26, %c0_27] : memref<1x4x8x8xbf16, #tpu.memory_space<vmem>>, vector<1x1x8x8xbf16>
    %31 = vector.shape_cast %30 : vector<1x1x8x8xbf16> to vector<8x8xbf16>
    %c0_28 = arith.constant 0 : index
    %c1_29 = arith.constant 1 : index
    %c0_30 = arith.constant 0 : index
    %c0_31 = arith.constant 0 : index
    %32 = vector.load %arg4[%c0_28, %c1_29, %c0_30, %c0_31] : memref<1x4x8x8xbf16, #tpu.memory_space<vmem>>, vector<1x1x8x8xbf16>
    %33 = vector.shape_cast %32 : vector<1x1x8x8xbf16> to vector<8x8xbf16>
    %c0_32 = arith.constant 0 : index
    %c1_33 = arith.constant 1 : index
    %c0_34 = arith.constant 0 : index
    %c0_35 = arith.constant 0 : index
    %34 = vector.load %arg5[%c0_32, %c1_33, %c0_34, %c0_35] : memref<1x4x8x8xbf16, #tpu.memory_space<vmem>>, vector<1x1x8x8xbf16>
    %35 = vector.shape_cast %34 : vector<1x1x8x8xbf16> to vector<8x8xbf16>
    %cst_36 = arith.constant dense<0.000000e+00> : vector<8x8xf32>
    %36 = tpu.matmul %31, %33, %cst_36 {dimension_numbers = #tpu.dot_dimension_numbers<[1], [1], [0], [0], [0, 0, 1, 0], [], []>} : vector<8x8xbf16>, vector<8x8xbf16>, vector<8x8xf32> -> vector<8x8xf32>
    %37 = vector.broadcast %3 : vector<1x8xf32> to vector<8x8xf32>
    %38 = arith.addf %36, %37 : vector<8x8xf32>
    %cst_37 = arith.constant dense<0xFF800000> : vector<8xf32>
    %39 = vector.multi_reduction <maximumf>, %38, %cst_37 [1] : vector<8x8xf32> to vector<8xf32>
    %40 = vector.shape_cast %39 : vector<8xf32> to vector<8x1xf32>
    %41 = vector.broadcast %40 : vector<8x1xf32> to vector<8x8xf32>
    %42 = arith.subf %38, %41 : vector<8x8xf32>
    %43 = math.exp %42 : vector<8x8xf32>
    %cst_38 = arith.constant dense<0.000000e+00> : vector<8xf32>
    %44 = vector.multi_reduction <add>, %43, %cst_38 [1] : vector<8x8xf32> to vector<8xf32>
    %45 = vector.shape_cast %44 : vector<8xf32> to vector<8x1xf32>
    %cst_39 = arith.constant 1.000000e+00 : f32
    %46 = vector.broadcast %cst_39 : f32 to vector<8x1xf32>
    %47 = arith.divf %46, %45 : vector<8x1xf32>
    %48 = vector.broadcast %47 : vector<8x1xf32> to vector<8x8xf32>
    %49 = arith.mulf %43, %48 : vector<8x8xf32>
    %50 = arith.truncf %49 : vector<8x8xf32> to vector<8x8xbf16>
    %c0_40 = arith.constant 0 : index
    %c1_41 = arith.constant 1 : index
    %c0_42 = arith.constant 0 : index
    %c0_43 = arith.constant 0 : index
    %51 = vector.load %arg10[%c0_40, %c1_41, %c0_42, %c0_43] : memref<1x4x8x8xbf16, #tpu.memory_space<vmem>>, vector<1x1x8x8xbf16>
    %52 = vector.shape_cast %51 : vector<1x1x8x8xbf16> to vector<8x8xbf16>
    %53 = vector.shape_cast %50 : vector<8x8xbf16> to vector<1x1x8x8xbf16>
    tpu.vector_store %arg10[%c0_40, %c1_41, %c0_42, %c0_43], %53 {strides = array<i32>} : memref<1x4x8x8xbf16, #tpu.memory_space<vmem>>, vector<1x1x8x8xbf16>,
    %54 = arith.truncf %49 : vector<8x8xf32> to vector<8x8xbf16>
    %cst_44 = arith.constant dense<0.000000e+00> : vector<8x8xf32>
    %55 = tpu.matmul %54, %35, %cst_44 {dimension_numbers = #tpu.dot_dimension_numbers<[1], [0], [0], [1], [0, 0, 1, 1], [], []>} : vector<8x8xbf16>, vector<8x8xbf16>, vector<8x8xf32> -> vector<8x8xf32>
    %c0_45 = arith.constant 0 : index
    %c2 = arith.constant 2 : index
    %c0_46 = arith.constant 0 : index
    %c0_47 = arith.constant 0 : index
    %56 = vector.load %arg3[%c0_45, %c2, %c0_46, %c0_47] : memref<1x4x8x8xbf16, #tpu.memory_space<vmem>>, vector<1x1x8x8xbf16>
    %57 = vector.shape_cast %56 : vector<1x1x8x8xbf16> to vector<8x8xbf16>
    %c0_48 = arith.constant 0 : index
    %c2_49 = arith.constant 2 : index
    %c0_50 = arith.constant 0 : index
    %c0_51 = arith.constant 0 : index
    %58 = vector.load %arg4[%c0_48, %c2_49, %c0_50, %c0_51] : memref<1x4x8x8xbf16, #tpu.memory_space<vmem>>, vector<1x1x8x8xbf16>
    %59 = vector.shape_cast %58 : vector<1x1x8x8xbf16> to vector<8x8xbf16>
    %c0_52 = arith.constant 0 : index
    %c2_53 = arith.constant 2 : index
    %c0_54 = arith.constant 0 : index
    %c0_55 = arith.constant 0 : index
    %60 = vector.load %arg5[%c0_52, %c2_53, %c0_54, %c0_55] : memref<1x4x8x8xbf16, #tpu.memory_space<vmem>>, vector<1x1x8x8xbf16>
    %61 = vector.shape_cast %60 : vector<1x1x8x8xbf16> to vector<8x8xbf16>
    %cst_56 = arith.constant dense<0.000000e+00> : vector<8x8xf32>
    %62 = tpu.matmul %57, %59, %cst_56 {dimension_numbers = #tpu.dot_dimension_numbers<[1], [1], [0], [0], [0, 0, 1, 0], [], []>} : vector<8x8xbf16>, vector<8x8xbf16>, vector<8x8xf32> -> vector<8x8xf32>
    %63 = vector.broadcast %3 : vector<1x8xf32> to vector<8x8xf32>
    %64 = arith.addf %62, %63 : vector<8x8xf32>
    %cst_57 = arith.constant dense<0xFF800000> : vector<8xf32>
    %65 = vector.multi_reduction <maximumf>, %64, %cst_57 [1] : vector<8x8xf32> to vector<8xf32>
    %66 = vector.shape_cast %65 : vector<8xf32> to vector<8x1xf32>
    %67 = vector.broadcast %66 : vector<8x1xf32> to vector<8x8xf32>
    %68 = arith.subf %64, %67 : vector<8x8xf32>
    %69 = math.exp %68 : vector<8x8xf32>
    %cst_58 = arith.constant dense<0.000000e+00> : vector<8xf32>
    %70 = vector.multi_reduction <add>, %69, %cst_58 [1] : vector<8x8xf32> to vector<8xf32>
    %71 = vector.shape_cast %70 : vector<8xf32> to vector<8x1xf32>
    %cst_59 = arith.constant 1.000000e+00 : f32
    %72 = vector.broadcast %cst_59 : f32 to vector<8x1xf32>
    %73 = arith.divf %72, %71 : vector<8x1xf32>
    %74 = vector.broadcast %73 : vector<8x1xf32> to vector<8x8xf32>
    %75 = arith.mulf %69, %74 : vector<8x8xf32>
    %76 = arith.truncf %75 : vector<8x8xf32> to vector<8x8xbf16>
    %c0_60 = arith.constant 0 : index
    %c2_61 = arith.constant 2 : index
    %c0_62 = arith.constant 0 : index
    %c0_63 = arith.constant 0 : index
    %77 = vector.load %arg10[%c0_60, %c2_61, %c0_62, %c0_63] : memref<1x4x8x8xbf16, #tpu.memory_space<vmem>>, vector<1x1x8x8xbf16>
    %78 = vector.shape_cast %77 : vector<1x1x8x8xbf16> to vector<8x8xbf16>
    %79 = vector.shape_cast %76 : vector<8x8xbf16> to vector<1x1x8x8xbf16>
    tpu.vector_store %arg10[%c0_60, %c2_61, %c0_62, %c0_63], %79 {strides = array<i32>} : memref<1x4x8x8xbf16, #tpu.memory_space<vmem>>, vector<1x1x8x8xbf16>,
    %80 = arith.truncf %75 : vector<8x8xf32> to vector<8x8xbf16>
    %cst_64 = arith.constant dense<0.000000e+00> : vector<8x8xf32>
    %81 = tpu.matmul %80, %61, %cst_64 {dimension_numbers = #tpu.dot_dimension_numbers<[1], [0], [0], [1], [0, 0, 1, 1], [], []>} : vector<8x8xbf16>, vector<8x8xbf16>, vector<8x8xf32> -> vector<8x8xf32>
    %c0_65 = arith.constant 0 : index
    %c3 = arith.constant 3 : index
    %c0_66 = arith.constant 0 : index
    %c0_67 = arith.constant 0 : index
    %82 = vector.load %arg3[%c0_65, %c3, %c0_66, %c0_67] : memref<1x4x8x8xbf16, #tpu.memory_space<vmem>>, vector<1x1x8x8xbf16>
    %83 = vector.shape_cast %82 : vector<1x1x8x8xbf16> to vector<8x8xbf16>
    %c0_68 = arith.constant 0 : index
    %c3_69 = arith.constant 3 : index
    %c0_70 = arith.constant 0 : index
    %c0_71 = arith.constant 0 : index
    %84 = vector.load %arg4[%c0_68, %c3_69, %c0_70, %c0_71] : memref<1x4x8x8xbf16, #tpu.memory_space<vmem>>, vector<1x1x8x8xbf16>
    %85 = vector.shape_cast %84 : vector<1x1x8x8xbf16> to vector<8x8xbf16>
    %c0_72 = arith.constant 0 : index
    %c3_73 = arith.constant 3 : index
    %c0_74 = arith.constant 0 : index
    %c0_75 = arith.constant 0 : index
    %86 = vector.load %arg5[%c0_72, %c3_73, %c0_74, %c0_75] : memref<1x4x8x8xbf16, #tpu.memory_space<vmem>>, vector<1x1x8x8xbf16>
    %87 = vector.shape_cast %86 : vector<1x1x8x8xbf16> to vector<8x8xbf16>
    %cst_76 = arith.constant dense<0.000000e+00> : vector<8x8xf32>
    %88 = tpu.matmul %83, %85, %cst_76 {dimension_numbers = #tpu.dot_dimension_numbers<[1], [1], [0], [0], [0, 0, 1, 0], [], []>} : vector<8x8xbf16>, vector<8x8xbf16>, vector<8x8xf32> -> vector<8x8xf32>
    %89 = vector.broadcast %3 : vector<1x8xf32> to vector<8x8xf32>
    %90 = arith.addf %88, %89 : vector<8x8xf32>
    %cst_77 = arith.constant dense<0xFF800000> : vector<8xf32>
    %91 = vector.multi_reduction <maximumf>, %90, %cst_77 [1] : vector<8x8xf32> to vector<8xf32>
    %92 = vector.shape_cast %91 : vector<8xf32> to vector<8x1xf32>
    %93 = vector.broadcast %92 : vector<8x1xf32> to vector<8x8xf32>
    %94 = arith.subf %90, %93 : vector<8x8xf32>
    %95 = math.exp %94 : vector<8x8xf32>
    %cst_78 = arith.constant dense<0.000000e+00> : vector<8xf32>
    %96 = vector.multi_reduction <add>, %95, %cst_78 [1] : vector<8x8xf32> to vector<8xf32>
    %97 = vector.shape_cast %96 : vector<8xf32> to vector<8x1xf32>
    %cst_79 = arith.constant 1.000000e+00 : f32
    %98 = vector.broadcast %cst_79 : f32 to vector<8x1xf32>
    %99 = arith.divf %98, %97 : vector<8x1xf32>
    %100 = vector.broadcast %99 : vector<8x1xf32> to vector<8x8xf32>
    %101 = arith.mulf %95, %100 : vector<8x8xf32>
    %102 = arith.truncf %101 : vector<8x8xf32> to vector<8x8xbf16>
    %c0_80 = arith.constant 0 : index
    %c3_81 = arith.constant 3 : index
    %c0_82 = arith.constant 0 : index
    %c0_83 = arith.constant 0 : index
    %103 = vector.load %arg10[%c0_80, %c3_81, %c0_82, %c0_83] : memref<1x4x8x8xbf16, #tpu.memory_space<vmem>>, vector<1x1x8x8xbf16>
    %104 = vector.shape_cast %103 : vector<1x1x8x8xbf16> to vector<8x8xbf16>
    %105 = vector.shape_cast %102 : vector<8x8xbf16> to vector<1x1x8x8xbf16>
    tpu.vector_store %arg10[%c0_80, %c3_81, %c0_82, %c0_83], %105 {strides = array<i32>} : memref<1x4x8x8xbf16, #tpu.memory_space<vmem>>, vector<1x1x8x8xbf16>,
    %106 = arith.truncf %101 : vector<8x8xf32> to vector<8x8xbf16>
    %cst_84 = arith.constant dense<0.000000e+00> : vector<8x8xf32>
    %107 = tpu.matmul %106, %87, %cst_84 {dimension_numbers = #tpu.dot_dimension_numbers<[1], [0], [0], [1], [0, 0, 1, 1], [], []>} : vector<8x8xbf16>, vector<8x8xbf16>, vector<8x8xf32> -> vector<8x8xf32>
    %108 = tpu.concatenate %29, %55, %81, %107 in 1 : vector<8x8xf32>, vector<8x8xf32>, vector<8x8xf32>, vector<8x8xf32> -> vector<8x32xf32>
    %109 = arith.truncf %108 : vector<8x32xf32> to vector<8x32xbf16>
    %c0_85 = arith.constant 0 : index
    %c0_86 = arith.constant 0 : index
    %110 = vector.load %arg7[%c0_85, %c0_86] : memref<32x32xbf16, #tpu.memory_space<vmem>>, vector<32x32xbf16>
    %cst_87 = arith.constant dense<0.000000e+00> : vector<8x32xf32>
    %111 = tpu.matmul %109, %110, %cst_87 {dimension_numbers = #tpu.dot_dimension_numbers<[1], [0], [0], [1], [0, 0, 1, 1], [], []>} : vector<8x32xbf16>, vector<32x32xbf16>, vector<8x32xf32> -> vector<8x32xf32>
    %c0_88 = arith.constant 0 : index
    %c0_89 = arith.constant 0 : index
    %112 = vector.load %arg8[%c0_88, %c0_89] : memref<1x32xf32, #tpu.memory_space<vmem>>, vector<1x32xf32>
    %113 = vector.broadcast %112 : vector<1x32xf32> to vector<8x32xf32>
    %114 = arith.addf %111, %113 : vector<8x32xf32>
    %115 = arith.addf %1, %114 : vector<8x32xf32>
    %cst_90 = arith.constant dense<0.000000e+00> : vector<8xf32>
    %116 = vector.multi_reduction <add>, %115, %cst_90 [1] : vector<8x32xf32> to vector<8xf32>
    %117 = vector.shape_cast %116 : vector<8xf32> to vector<8x1xf32>
    %cst_91 = arith.constant 3.200000e+01 : f32
    %118 = vector.broadcast %cst_91 : f32 to vector<8x1xf32>
    %119 = arith.divf %117, %118 : vector<8x1xf32>
    %120 = vector.broadcast %119 : vector<8x1xf32> to vector<8x32xf32>
    %121 = arith.subf %115, %120 : vector<8x32xf32>
    %122 = arith.mulf %121, %121 : vector<8x32xf32>
    %cst_92 = arith.constant dense<0.000000e+00> : vector<8xf32>
    %123 = vector.multi_reduction <add>, %122, %cst_92 [1] : vector<8x32xf32> to vector<8xf32>
    %124 = vector.shape_cast %123 : vector<8xf32> to vector<8x1xf32>
    %cst_93 = arith.constant 3.200000e+01 : f32
    %125 = vector.broadcast %cst_93 : f32 to vector<8x1xf32>
    %126 = arith.divf %124, %125 : vector<8x1xf32>
    %127 = vector.broadcast %119 : vector<8x1xf32> to vector<8x32xf32>
    %128 = arith.subf %115, %127 : vector<8x32xf32>
    %cst_94 = arith.constant 9.99999997E-7 : f32
    %129 = vector.broadcast %cst_94 : f32 to vector<8x1xf32>
    %130 = arith.addf %126, %129 : vector<8x1xf32>
    %131 = math.rsqrt %130 : vector<8x1xf32>
    %132 = vector.broadcast %131 : vector<8x1xf32> to vector<8x32xf32>
    %133 = arith.mulf %128, %132 : vector<8x32xf32>
    %c0_95 = arith.constant 0 : index
    %c0_96 = arith.constant 0 : index
    %c0_97 = arith.constant 0 : index
    %134 = vector.load %arg9[%c0_95, %c0_96, %c0_97] : memref<1x8x32xf32, #tpu.memory_space<vmem>>, vector<1x8x32xf32>
    %135 = vector.shape_cast %134 : vector<1x8x32xf32> to vector<8x32xf32>
    %136 = vector.shape_cast %133 : vector<8x32xf32> to vector<1x8x32xf32>
    tpu.vector_store %arg9[%c0_95, %c0_96, %c0_97], %136 {strides = array<i32>} : memref<1x8x32xf32, #tpu.memory_space<vmem>>, vector<1x8x32xf32>,
    return
  }
  func.func @transform_0(%arg0: i32, %arg1: i32) -> (i32, i32, i32) {
    %c0_i32 = arith.constant 0 : i32
    %c0_i32_0 = arith.constant 0 : i32
    return %arg0, %arg1, %c0_i32 : i32, i32, i32
  }
  func.func @transform_1(%arg0: i32, %arg1: i32) -> (i32, i32, i32, i32) {
    %c0_i32 = arith.constant 0 : i32
    %c0_i32_0 = arith.constant 0 : i32
    %c0_i32_1 = arith.constant 0 : i32
    return %arg0, %c0_i32, %arg1, %c0_i32_0 : i32, i32, i32, i32
  }
  func.func @transform_2(%arg0: i32, %arg1: i32) -> (i32, i32, i32, i32) {
    %c0_i32 = arith.constant 0 : i32
    %c0_i32_0 = arith.constant 0 : i32
    %c0_i32_1 = arith.constant 0 : i32
    %c0_i32_2 = arith.constant 0 : i32
    return %arg0, %c0_i32, %c0_i32_0, %c0_i32_1 : i32, i32, i32, i32
  }
  func.func @transform_3(%arg0: i32, %arg1: i32) -> (i32, i32, i32, i32) {
    %c0_i32 = arith.constant 0 : i32
    %c0_i32_0 = arith.constant 0 : i32
    %c0_i32_1 = arith.constant 0 : i32
    %c0_i32_2 = arith.constant 0 : i32
    return %arg0, %c0_i32, %c0_i32_0, %c0_i32_1 : i32, i32, i32, i32
  }
  func.func @transform_4(%arg0: i32, %arg1: i32) -> (i32, i32, i32) {
    %c0_i32 = arith.constant 0 : i32
    %c0_i32_0 = arith.constant 0 : i32
    %c0_i32_1 = arith.constant 0 : i32
    return %arg0, %c0_i32, %c0_i32_0 : i32, i32, i32
  }
  func.func @transform_5(%arg0: i32, %arg1: i32) -> (i32, i32) {
    %c0_i32 = arith.constant 0 : i32
    %c0_i32_0 = arith.constant 0 : i32
    %c0_i32_1 = arith.constant 0 : i32
    return %c0_i32, %c0_i32_0 : i32, i32
  }
  func.func @transform_6(%arg0: i32, %arg1: i32) -> (i32, i32) {
    %c0_i32 = arith.constant 0 : i32
    %c0_i32_0 = arith.constant 0 : i32
    %c0_i32_1 = arith.constant 0 : i32
    return %c0_i32, %c0_i32_0 : i32, i32
  }
  func.func @transform_7(%arg0: i32, %arg1: i32) -> (i32, i32, i32) {
    %c0_i32 = arith.constant 0 : i32
    %c0_i32_0 = arith.constant 0 : i32
    return %arg0, %arg1, %c0_i32 : i32, i32, i32
  }
  func.func @transform_8(%arg0: i32, %arg1: i32) -> (i32, i32, i32, i32) {
    %c0_i32 = arith.constant 0 : i32
    %c0_i32_0 = arith.constant 0 : i32
    %c0_i32_1 = arith.constant 0 : i32
    return %arg0, %c0_i32, %arg1, %c0_i32_0 : i32, i32, i32, i32
  }
}

module attributes {stable_mosaic.version = 11 : i64} {
  func.func @ffn_kernel(%arg0: i32, %arg1: memref<16x32xf32, #tpu.memory_space<vmem>>, %arg2: memref<32x64xbf16, #tpu.memory_space<vmem>>, %arg3: memref<1x64xf32, #tpu.memory_space<vmem>>, %arg4: memref<64x32xbf16, #tpu.memory_space<vmem>>, %arg5: memref<1x32xf32, #tpu.memory_space<vmem>>, %arg6: memref<16x32xf32, #tpu.memory_space<vmem>>) attributes {dimension_semantics = [#tpu.dimension_semantics<parallel>], iteration_bounds = array<i64: 1>, scalar_prefetch = 0 : i64, scratch_operands = 0 : i64, tpu.core_type = #tpu.core_type<tc>, window_params = [{transform_indices = @transform_0, window_bounds = array<i64: 16, 32>}, {pipeline_mode = #tpu.pipeline_mode<synchronous>, transform_indices = @transform_1, window_bounds = array<i64: 32, 64>}, {pipeline_mode = #tpu.pipeline_mode<synchronous>, transform_indices = @transform_2, window_bounds = array<i64: 1, 64>}, {pipeline_mode = #tpu.pipeline_mode<synchronous>, transform_indices = @transform_3, window_bounds = array<i64: 64, 32>}, {pipeline_mode = #tpu.pipeline_mode<synchronous>, transform_indices = @transform_4, window_bounds = array<i64: 1, 32>}, {transform_indices = @transform_5, window_bounds = array<i64: 16, 32>}]} {
    %c0 = arith.constant 0 : index
    %c0_0 = arith.constant 0 : index
    %0 = vector.load %arg1[%c0, %c0_0] : memref<16x32xf32, #tpu.memory_space<vmem>>, vector<16x32xf32>
    %1 = arith.truncf %0 : vector<16x32xf32> to vector<16x32xbf16>
    %c0_1 = arith.constant 0 : index
    %c0_2 = arith.constant 0 : index
    %2 = vector.load %arg2[%c0_1, %c0_2] : memref<32x64xbf16, #tpu.memory_space<vmem>>, vector<32x64xbf16>
    %cst = arith.constant dense<0.000000e+00> : vector<16x64xf32>
    %3 = tpu.matmul %1, %2, %cst {dimension_numbers = #tpu.dot_dimension_numbers<[1], [0], [0], [1], [0, 0, 1, 1], [], []>} : vector<16x32xbf16>, vector<32x64xbf16>, vector<16x64xf32> -> vector<16x64xf32>
    %c0_3 = arith.constant 0 : index
    %c0_4 = arith.constant 0 : index
    %4 = vector.load %arg3[%c0_3, %c0_4] : memref<1x64xf32, #tpu.memory_space<vmem>>, vector<1x64xf32>
    %5 = vector.broadcast %4 : vector<1x64xf32> to vector<16x64xf32>
    %6 = arith.addf %3, %5 : vector<16x64xf32>
    %7 = arith.mulf %6, %6 : vector<16x64xf32>
    %8 = arith.mulf %6, %7 : vector<16x64xf32>
    %cst_5 = arith.constant 4.471500e-02 : f32
    %9 = vector.broadcast %cst_5 : f32 to vector<16x64xf32>
    %10 = arith.mulf %9, %8 : vector<16x64xf32>
    %11 = arith.addf %6, %10 : vector<16x64xf32>
    %cst_6 = arith.constant 0.797884583 : f32
    %12 = vector.broadcast %cst_6 : f32 to vector<16x64xf32>
    %13 = arith.mulf %12, %11 : vector<16x64xf32>
    %14 = math.tanh %13 : vector<16x64xf32>
    %cst_7 = arith.constant 1.000000e+00 : f32
    %15 = vector.broadcast %cst_7 : f32 to vector<16x64xf32>
    %16 = arith.addf %15, %14 : vector<16x64xf32>
    %cst_8 = arith.constant 5.000000e-01 : f32
    %17 = vector.broadcast %cst_8 : f32 to vector<16x64xf32>
    %18 = arith.mulf %17, %16 : vector<16x64xf32>
    %19 = arith.mulf %6, %18 : vector<16x64xf32>
    %20 = arith.truncf %19 : vector<16x64xf32> to vector<16x64xbf16>
    %c0_9 = arith.constant 0 : index
    %c0_10 = arith.constant 0 : index
    %21 = vector.load %arg4[%c0_9, %c0_10] : memref<64x32xbf16, #tpu.memory_space<vmem>>, vector<64x32xbf16>
    %cst_11 = arith.constant dense<0.000000e+00> : vector<16x32xf32>
    %22 = tpu.matmul %20, %21, %cst_11 {dimension_numbers = #tpu.dot_dimension_numbers<[1], [0], [0], [1], [0, 0, 1, 1], [], []>} : vector<16x64xbf16>, vector<64x32xbf16>, vector<16x32xf32> -> vector<16x32xf32>
    %c0_12 = arith.constant 0 : index
    %c0_13 = arith.constant 0 : index
    %23 = vector.load %arg5[%c0_12, %c0_13] : memref<1x32xf32, #tpu.memory_space<vmem>>, vector<1x32xf32>
    %24 = vector.broadcast %23 : vector<1x32xf32> to vector<16x32xf32>
    %25 = arith.addf %22, %24 : vector<16x32xf32>
    %26 = arith.addf %25, %0 : vector<16x32xf32>
    %cst_14 = arith.constant dense<0.000000e+00> : vector<16xf32>
    %27 = vector.multi_reduction <add>, %26, %cst_14 [1] : vector<16x32xf32> to vector<16xf32>
    %28 = vector.shape_cast %27 : vector<16xf32> to vector<16x1xf32>
    %cst_15 = arith.constant 3.200000e+01 : f32
    %29 = vector.broadcast %cst_15 : f32 to vector<16x1xf32>
    %30 = arith.divf %28, %29 : vector<16x1xf32>
    %31 = vector.broadcast %30 : vector<16x1xf32> to vector<16x32xf32>
    %32 = arith.subf %26, %31 : vector<16x32xf32>
    %33 = arith.mulf %32, %32 : vector<16x32xf32>
    %cst_16 = arith.constant dense<0.000000e+00> : vector<16xf32>
    %34 = vector.multi_reduction <add>, %33, %cst_16 [1] : vector<16x32xf32> to vector<16xf32>
    %35 = vector.shape_cast %34 : vector<16xf32> to vector<16x1xf32>
    %cst_17 = arith.constant 3.200000e+01 : f32
    %36 = vector.broadcast %cst_17 : f32 to vector<16x1xf32>
    %37 = arith.divf %35, %36 : vector<16x1xf32>
    %38 = vector.broadcast %30 : vector<16x1xf32> to vector<16x32xf32>
    %39 = arith.subf %26, %38 : vector<16x32xf32>
    %cst_18 = arith.constant 9.99999997E-7 : f32
    %40 = vector.broadcast %cst_18 : f32 to vector<16x1xf32>
    %41 = arith.addf %37, %40 : vector<16x1xf32>
    %42 = math.rsqrt %41 : vector<16x1xf32>
    %43 = vector.broadcast %42 : vector<16x1xf32> to vector<16x32xf32>
    %44 = arith.mulf %39, %43 : vector<16x32xf32>
    %c0_19 = arith.constant 0 : index
    %c0_20 = arith.constant 0 : index
    %45 = vector.load %arg6[%c0_19, %c0_20] : memref<16x32xf32, #tpu.memory_space<vmem>>, vector<16x32xf32>
    tpu.vector_store %arg6[%c0_19, %c0_20], %44 {strides = array<i32>} : memref<16x32xf32, #tpu.memory_space<vmem>>, vector<16x32xf32>,
    return
  }
  func.func @transform_0(%arg0: i32) -> (i32, i32) {
    %c0_i32 = arith.constant 0 : i32
    %c0_i32_0 = arith.constant 0 : i32
    return %arg0, %c0_i32 : i32, i32
  }
  func.func @transform_1(%arg0: i32) -> (i32, i32) {
    %c0_i32 = arith.constant 0 : i32
    %c0_i32_0 = arith.constant 0 : i32
    %c0_i32_1 = arith.constant 0 : i32
    return %c0_i32, %c0_i32_0 : i32, i32
  }
  func.func @transform_2(%arg0: i32) -> (i32, i32) {
    %c0_i32 = arith.constant 0 : i32
    %c0_i32_0 = arith.constant 0 : i32
    %c0_i32_1 = arith.constant 0 : i32
    return %c0_i32, %c0_i32_0 : i32, i32
  }
  func.func @transform_3(%arg0: i32) -> (i32, i32) {
    %c0_i32 = arith.constant 0 : i32
    %c0_i32_0 = arith.constant 0 : i32
    %c0_i32_1 = arith.constant 0 : i32
    return %c0_i32, %c0_i32_0 : i32, i32
  }
  func.func @transform_4(%arg0: i32) -> (i32, i32) {
    %c0_i32 = arith.constant 0 : i32
    %c0_i32_0 = arith.constant 0 : i32
    %c0_i32_1 = arith.constant 0 : i32
    return %c0_i32, %c0_i32_0 : i32, i32
  }
  func.func @transform_5(%arg0: i32) -> (i32, i32) {
    %c0_i32 = arith.constant 0 : i32
    %c0_i32_0 = arith.constant 0 : i32
    return %arg0, %c0_i32 : i32, i32
  }
}

</mosaic_0001>

<llo_original>
// kernel: custom-call.4
$region0: #{custom-call.4}
  %s0 = inlined_call_operand.vmem [shape: bf16[2,2,4,8,8], index: 0, kind: output, shape index: {}]

// kernel: closed_call.12
$region0: #{closed_call.12}
  #allocation0 [shape = 'u32[]', space=smem, size = 0x4, offset = 0x4, fixed_abs, tag = 'smem constant byte address 0x4 - core index']
  #allocation1 [shape = 'u32[144,128]{1,0:T(1,128)}', space=vmem, size = 0x12000, scoped, tag = 'internal scratch']
  %s0 = inlined_call_operand.vmem [shape: f32[16,32], index: 0, kind: input, shape index: {}]
  %s1 = inlined_call_operand.vmem [shape: bf16[32,64], index: 1, kind: input, shape index: {}]
  %s2 = inlined_call_operand.vmem [shape: f32[1,64], index: 2, kind: input, shape index: {}]
  %s3 = inlined_call_operand.vmem [shape: bf16[64,32], index: 3, kind: input, shape index: {}]
  %s4 = inlined_call_operand.vmem [shape: f32[1,32], index: 4, kind: input, shape index: {}]
  %s5 = inlined_call_operand.vmem [shape: f32[16,32], index: 5, kind: output, shape index: {}]
  %s6 = sld [smem:[#allocation0]]
  $region30: #{closed_call.12} parent=0
    _
  %s8 = ssub.s32 1, %s6
  %s9 = scalar_select 0, %s8, %s6
  // Predicated region
  $region2: #{closed_call.12} parent=0 // pred_check
    _
  $region3: #{closed_call.12} parent=0 // pred_check_branch
    %11 = sbr.rel (0) target = $region5
  $region4: #{closed_call.12} parent=0 // pred_region
    _
  $region5: #{closed_call.12} parent=0 // pred_fallthru
    _
  // Predicated region
  $region6: #{closed_call.12} parent=0 // pred_check
    _
  $region7: #{closed_call.12} parent=0 // pred_check_branch
    %13 = sbr.rel (0) target = $region9
  $region8: #{closed_call.12} parent=0 // pred_region
    _
  $region9: #{closed_call.12} parent=0 // pred_fallthru
    _
  // Predicated region
  $region10: #{closed_call.12} parent=0 // pred_check
    _
  $region11: #{closed_call.12} parent=0 // pred_check_branch
    %15 = sbr.rel (0) target = $region13
  $region12: #{closed_call.12} parent=0 // pred_region
    _
  $region13: #{closed_call.12} parent=0 // pred_fallthru
    _
  // Predicated region
  $region14: #{closed_call.12} parent=0 // pred_check
    _
  $region15: #{closed_call.12} parent=0 // pred_check_branch
    %17 = sbr.rel (0) target = $region17
  $region16: #{closed_call.12} parent=0 // pred_region
    _
  $region17: #{closed_call.12} parent=0 // pred_fallthru
    _
  // Predicated region
  $region18: #{closed_call.12} parent=0 // pred_check
    _
  $region19: #{closed_call.12} parent=0 // pred_check_branch
    %19 = sbr.rel (0) target = $region21
  $region20: #{closed_call.12} parent=0 // pred_region
    _
  $region21: #{closed_call.12} parent=0 // pred_fallthru
    _
  %v21 = vld [vmem:[%s0] sm:$0xff]
  %v22 = vld [vmem:[%s0 + $0x8] sm:$0xff]
  %v23 = vpack.c.bf16 %v22, %v21
  %v24 = vld [vmem:[%s1] sm:$0xf]
  %v25 = vld [vmem:[%s1 + $0x4] sm:$0xf]
  %v26 = vld [vmem:[%s1 + $0x8] sm:$0xf]
  %v27 = vld [vmem:[%s1 + $0xc] sm:$0xf]
  %v28 = vld [vmem:[%s2] sm:$0x1]
  %v30 = vlaneseq
  %v31 = vshrl.u32 %v30, 7
  %v32 = vsub.s32 0, %v31
  %v33 = vrot.slane %v28, %v32
  %v39 = vunpack.c.l.b16 %v24
  %v40 = vunpack.c.l.b16 %v25
  %v41 = vunpack.c.l.b16 %v26
  %v42 = vunpack.c.l.b16 %v27
  %v43 = vpack.c.b16 %v40, %v39
  %v44 = vpack.c.b16 %v42, %v41
  %vm47 = vcmask 261120
  %v49 = vsel %vm47, %v23, 0
  %51 = vmatprep.subr.bf16.mxu0 0
  %52 = vmatpush1.bf16.msra.mxu0 0
  %53 = vmatprep.subr.bf16.mxu0 0
  %54 = vmatpush1.bf16.msra.mxu0 0
  %55 = vmatprep.subr.bf16.mxu0 0
  %56 = vmatpush1.bf16.msra.mxu0 0
  %57 = vmatprep.subr.bf16.mxu0 0
  %58 = vmatpush1.bf16.msra.mxu0 0
  %59 = vmatprep.subr.bf16.mxu0 0
  %60 = vmatpush1.bf16.msra.mxu0 0
  %61 = vmatprep.subr.bf16.mxu0 0
  %62 = vmatpush1.bf16.msra.mxu0 0
  %63 = vmatprep.subr.bf16.mxu0 0
  %64 = vmatpush1.bf16.msra.mxu0 %v44
  %65 = vmatprep.subr.bf16.mxu0 0
  %66 = vmatpush1.bf16.msra.mxu0 %v43
  %67 = vmatprep.subr.bf16.mxu0 0
  %68 = vmatpush2.bf16.msra.mxu0 0
  %69 = vmatprep.subr.bf16.mxu0 0
  %70 = vmatpush2.bf16.msra.mxu0 0
  %71 = vmatprep.subr.bf16.mxu0 0
  %72 = vmatpush2.bf16.msra.mxu0 0
  %73 = vmatprep.subr.bf16.mxu0 0
  %74 = vmatpush2.bf16.msra.mxu0 0
  %75 = vmatprep.subr.bf16.mxu0 0
  %76 = vmatpush2.bf16.msra.mxu0 0
  %77 = vmatprep.subr.bf16.mxu0 0
  %78 = vmatpush2.bf16.msra.mxu0 0
  %79 = vmatprep.subr.bf16.mxu0 0
  %80 = vmatpush2.bf16.msra.mxu0 0
  %81 = vmatprep.subr.bf16.mxu0 0
  %82 = vmatpush2.bf16.msra.mxu0 0
  %83 = vmatprep.mubr.bf16.mxu0 0
  %84 = vmatmul.mubr.bf16.gmra.mxu0 %v49
  %v85 = vpop.f32.mrf.mxu0
  %v86 = vadd.f32 %v33, %v85
  %v87 = vpop.f32.mrf.mxu0
  %v88 = vpop.f32.mrf.mxu0
  %v89 = vadd.f32 %v33, %v88
  %v90 = vpop.f32.mrf.mxu0
  %91 = vdwg.mxu0
  %v92 = vmul.f32 %v86, %v86
  %v93 = vmul.f32 %v89, %v89
  %v94 = vmul.f32 %v86, %v92
  %v95 = vmul.f32 %v89, %v93
  %v96 = vmul.f32 %v94, 0.044715
  %v97 = vmul.f32 %v95, 0.044715
  %v98 = vadd.f32 %v86, %v96
  %v99 = vadd.f32 %v89, %v97
  %v100 = vmul.f32 %v98, 0.7978846
  %v101 = vmul.f32 %v99, 0.7978846
  %v102 = vtanh.pop %v100
  %v103 = vtanh.pop %v101
  %v104 = vadd.f32 %v102, 1.0
  %v105 = vadd.f32 %v103, 1.0
  %v106 = vmul.f32 %v104, 0.5
  %v107 = vmul.f32 %v105, 0.5
  %v108 = vmul.f32 %v86, %v106
  %v109 = vmul.f32 %v89, %v107
  %v110 = vpack.c.bf16 %v109, %v108
  %v111 = vld [vmem:[%s3] sm:$0xf]
  %v112 = vld [vmem:[%s3 + $0x4] sm:$0xf]
  %v113 = vld [vmem:[%s3 + $0x8] sm:$0xf]
  %v114 = vld [vmem:[%s3 + $0xc] sm:$0xf]
  %v115 = vld [vmem:[%s3 + $0x10] sm:$0xf]
  %v116 = vld [vmem:[%s3 + $0x14] sm:$0xf]
  %v117 = vld [vmem:[%s3 + $0x18] sm:$0xf]
  %v118 = vld [vmem:[%s3 + $0x1c] sm:$0xf]
  %v119 = vld [vmem:[%s4] sm:$0x1]
  %v121 = vlaneseq
  %v122 = vshrl.u32 %v121, 7
  %v123 = vsub.s32 0, %v122
  %v124 = vrot.slane %v119, %v123
  %v134 = vunpack.c.l.b16 %v111
  %v135 = vunpack.c.l.b16 %v112
  %v136 = vunpack.c.l.b16 %v113
  %v137 = vunpack.c.l.b16 %v114
  %v138 = vunpack.c.l.b16 %v115
  %v139 = vunpack.c.l.b16 %v116
  %v140 = vunpack.c.l.b16 %v117
  %v141 = vunpack.c.l.b16 %v118
  %v142 = vpack.c.b16 %v135, %v134
  %v143 = vpack.c.b16 %v137, %v136
  %v144 = vpack.c.b16 %v139, %v138
  %v145 = vpack.c.b16 %v141, %v140
  %vm150 = vcmask 523264
  %v152 = vsel %vm150, %v110, 0
  %154 = vmatprep.subr.bf16.mxu0 0
  %155 = vmatpush1.bf16.msra.mxu0 0
  %156 = vmatprep.subr.bf16.mxu0 0
  %157 = vmatpush1.bf16.msra.mxu0 0
  %158 = vmatprep.subr.bf16.mxu0 0
  %159 = vmatpush1.bf16.msra.mxu0 0
  %160 = vmatprep.subr.bf16.mxu0 0
  %161 = vmatpush1.bf16.msra.mxu0 0
  %162 = vmatprep.subr.bf16.mxu0 0
  %163 = vmatpush1.bf16.msra.mxu0 %v145
  %164 = vmatprep.subr.bf16.mxu0 0
  %165 = vmatpush1.bf16.msra.mxu0 %v144
  %166 = vmatprep.subr.bf16.mxu0 0
  %167 = vmatpush1.bf16.msra.mxu0 %v143
  %168 = vmatprep.subr.bf16.mxu0 0
  %169 = vmatpush1.bf16.msra.mxu0 %v142
  %170 = vmatprep.subr.bf16.mxu0 0
  %171 = vmatpush2.bf16.msra.mxu0 0
  %172 = vmatprep.subr.bf16.mxu0 0
  %173 = vmatpush2.bf16.msra.mxu0 0
  %174 = vmatprep.subr.bf16.mxu0 0
  %175 = vmatpush2.bf16.msra.mxu0 0
  %176 = vmatprep.subr.bf16.mxu0 0
  %177 = vmatpush2.bf16.msra.mxu0 0
  %178 = vmatprep.subr.bf16.mxu0 0
  %179 = vmatpush2.bf16.msra.mxu0 0
  %180 = vmatprep.subr.bf16.mxu0 0
  %181 = vmatpush2.bf16.msra.mxu0 0
  %182 = vmatprep.subr.bf16.mxu0 0
  %183 = vmatpush2.bf16.msra.mxu0 0
  %184 = vmatprep.subr.bf16.mxu0 0
  %185 = vmatpush2.bf16.msra.mxu0 0
  %186 = vmatprep.mubr.bf16.mxu0 0
  %187 = vmatmul.mubr.bf16.gmra.mxu0 %v152
  %v188 = vpop.f32.mrf.mxu0
  %v189 = vadd.f32 %v124, %v188
  %v190 = vpop.f32.mrf.mxu0
  %v191 = vpop.f32.mrf.mxu0
  %v192 = vadd.f32 %v124, %v191
  %v193 = vpop.f32.mrf.mxu0
  %194 = vdwg.mxu0
  %v195 = vadd.f32 %v189, %v21
  %v196 = vadd.f32 %v192, %v22
  %v197 = vsel %vm47, %v195, 0.0
  %198 = vadd.xlane.f32.xlu0 %v197
  %v199 = vpop.xlane.xlu0 %198
  %v200 = vsel %vm47, %v196, 0.0
  %201 = vadd.xlane.f32.xlu0 %v200
  %v202 = vpop.xlane.xlu0 %201
  %v203 = vrcp.pop 32.0
  %v204 = vmul.f32 %v199, %v203
  %v205 = vmul.f32 %v202, %v203
  %v206 = vsub.f32 %v195, %v204
  %v207 = vsub.f32 %v196, %v205
  %v208 = vmul.f32 %v206, %v206
  %v209 = vmul.f32 %v207, %v207
  %v210 = vsel %vm47, %v208, 0.0
  %211 = vadd.xlane.f32.xlu0 %v210
  %v212 = vpop.xlane.xlu0 %211
  %v213 = vsel %vm47, %v209, 0.0
  %214 = vadd.xlane.f32.xlu0 %v213
  %v215 = vpop.xlane.xlu0 %214
  %v216 = vmul.f32 %v212, %v203
  %v217 = vmul.f32 %v215, %v203
  %v218 = vadd.f32 %v216, 1e-06
  %v219 = vadd.f32 %v217, 1e-06
  %v220 = vrsqrt.pop %v218
  %v221 = vrsqrt.pop %v219
  %v222 = vmul.f32 %v206, %v220
  %v223 = vmul.f32 %v207, %v221
  %224 = vst.msk [vmem:[%s5] sm:$0xff] %vm47, %v222
  %225 = vst.msk [vmem:[%s5 + $0x8] sm:$0xff] %vm47, %v223
  // Predicated region
  $region22: #{closed_call.12} parent=0 // pred_check
    _
  $region23: #{closed_call.12} parent=0 // pred_check_branch
    %227 = sbr.rel (0) target = $region25
  $region24: #{closed_call.12} parent=0 // pred_region
    _
  $region25: #{closed_call.12} parent=0 // pred_fallthru
    _
  // Predicated region
  $region26: #{closed_call.12} parent=0 // pred_check
    _
  $region27: #{closed_call.12} parent=0 // pred_check_branch
    %229 = sbr.rel (0) target = $region29
  $region28: #{closed_call.12} parent=0 // pred_region
    _
  $region29: #{closed_call.12} parent=0 // pred_fallthru
    _

// kernel: closed_call.11
$region0: #{closed_call.11}
  #allocation0 [shape = 'u32[]', space=smem, size = 0x4, offset = 0x4, fixed_abs, tag = 'smem constant byte address 0x4 - core index']
  #allocation1 [shape = 'u32[144,128]{1,0:T(1,128)}', space=vmem, size = 0x12000, scoped, tag = 'internal scratch']
  %s0 = inlined_call_operand.vmem [shape: f32[2,8,32], index: 0, kind: input, shape index: {}]
  %s1 = inlined_call_operand.vmem [shape: bf16[2,4,8,8], index: 1, kind: input, shape index: {}]
  %s2 = inlined_call_operand.vmem [shape: bf16[2,4,8,8], index: 2, kind: input, shape index: {}]
  %s3 = inlined_call_operand.vmem [shape: bf16[2,4,8,8], index: 3, kind: input, shape index: {}]
  %s4 = inlined_call_operand.vmem [shape: f32[2,1,8], index: 4, kind: input, shape index: {}]
  %s5 = inlined_call_operand.vmem [shape: bf16[32,32], index: 5, kind: input, shape index: {}]
  %s6 = inlined_call_operand.vmem [shape: f32[1,32], index: 6, kind: input, shape index: {}]
  %s7 = inlined_call_operand.vmem [shape: f32[2,8,32], index: 7, kind: output, shape index: {0}]
  %s8 = inlined_call_operand.vmem [shape: bf16[2,4,8,8], index: 8, kind: output, shape index: {1}]
  %9 = xla_tuple %s7, %s8
  %s10 = sld [smem:[#allocation0]]
  $region69: #{closed_call.11} parent=0
    _
  %s12 = ssub.s32 1, %s10
  %s13 = scalar_select 0, %s12, %s10
  loop: start=0, step=1, limit=4
  $region2: #{closed_call.11} parent=0 // loop_pre_header
    _
  $region3: #{closed_call.11} parent=0 // loop_header
    %s15 = sphi 0, %s19
    %p16 = scmp.ge.s32.totalorder %s15, 4
    %s22 = sphi 0, %s34
    %s23 = sphi 0, %s30
    %s24 = sphi 0, %s22
    %s25 = sphi 0, %s23
    %s26 = sphi 0, %s24
    %s27 = sphi 0, %s25
    %s39 = sphi 0, %s41
    %s42 = sphi 0, %s39
    %s43 = sphi 0, %s42
    %s59 = sphi 0, %s43
    %s67 = sphi 0, %s69
    %s70 = sphi 0, %s67
    %s71 = sphi 0, %s70
    %s87 = sphi 0, %s71
    %s93 = sphi 0, %s95
    %s96 = sphi 0, %s93
    %s97 = sphi 0, %s96
    %s113 = sphi 0, %s97
    %s119 = sphi 0, %s121
    %s122 = sphi 0, %s119
    %s123 = sphi 0, %s122
    %s139 = sphi 0, %s123
    %s145 = sphi 0, %s147
    %s148 = sphi 0, %s145
    %s149 = sphi 0, %s148
    %s165 = sphi 0, %s149
    %s169 = sphi 0, %s169
    %s171 = sphi 0, %s169
    %s172 = sphi 0, %s171
    %s186 = sphi 0, %s172
    %s190 = sphi 0, %s190
    %s192 = sphi 0, %s190
    %s193 = sphi 0, %s192
    %s207 = sphi 0, %s193
    %s215 = sphi 0, %s217
    %s218 = sphi 0, %s215
    %s219 = sphi 0, %s218
    %s235 = sphi 0, %s219
    %s243 = sphi 0, %s245
    %s246 = sphi 0, %s243
    %s247 = sphi 0, %s246
    %s263 = sphi 0, %s247
  $region4: #{closed_call.11} parent=0 // loop_header_branch
    %18 = sbr.rel (%p16) target = $region8
  $region5: #{closed_call.11} parent=0 // loop_body
    %s20 = ssub.s32 %s15, 1
    %s21 = ssub.s32 %s15, 2
    %s28 = sadd.s32 1, %s23
    %p29 = scmp.ge.s32.totalorder %s28, 1
    %s30 = scalar_select %p29, 0, %s28
    %s31 = sadd.s32 1, %s22
    %s32 = scalar_select %p29, %s31, %s22
    %p33 = scmp.ge.s32.totalorder %s32, 2
    %s34 = scalar_select %p33, 0, %s32
    %s35 = ssub.s32 %s22, %s34
    %s36 = ssub.s32 %s23, %s30
    %s37 = sor.u32 %s35, %s36
    %p38 = scmp.eq.s32.totalorder %s37, 0
    %s40 = sadd.s32 %s39, 1
    %s41 = scalar_select %p38, %s39, %s40
    %p44 = pneg %p38
    %p45 = scmp.eq.s32.totalorder %s15, 1
    %p46 = por %p44, %p45
    %p47 = scmp.ne.s32.totalorder %s39, %s42
    %p48 = scmp.eq.s32.totalorder %s15, 0
    %p49 = por %p47, %p48
    %p50 = scmp.ne.s32.totalorder %s39, %s42
    %p51 = scmp.eq.s32.totalorder %s20, 1
    %p52 = por %p50, %p51
    %p53 = scmp.ne.s32.totalorder %s42, %s43
    %p54 = scmp.eq.s32.totalorder %s20, 0
    %p55 = por %p53, %p54
    %p56 = scmp.ne.s32.totalorder %s42, %s43
    %p57 = scmp.eq.s32.totalorder %s21, 1
    %p58 = por %p56, %p57
    %p60 = scmp.ne.s32.totalorder %s43, %s59
    %p61 = scmp.eq.s32.totalorder %s21, 0
    %p62 = por %p60, %p61
    %s63 = ssub.s32 %s22, %s34
    %s64 = ssub.s32 %s23, %s30
    %s65 = sor.u32 %s63, %s64
    %p66 = scmp.eq.s32.totalorder %s65, 0
    %s68 = sadd.s32 %s67, 1
    %s69 = scalar_select %p66, %s67, %s68
    %p72 = pneg %p66
    %p73 = scmp.eq.s32.totalorder %s15, 1
    %p74 = por %p72, %p73
    %p75 = scmp.ne.s32.totalorder %s67, %s70
    %p76 = scmp.eq.s32.totalorder %s15, 0
    %p77 = por %p75, %p76
    %p78 = scmp.ne.s32.totalorder %s67, %s70
    %p79 = scmp.eq.s32.totalorder %s20, 1
    %p80 = por %p78, %p79
    %p81 = scmp.ne.s32.totalorder %s70, %s71
    %p82 = scmp.eq.s32.totalorder %s20, 0
    %p83 = por %p81, %p82
    %p84 = scmp.ne.s32.totalorder %s70, %s71
    %p85 = scmp.eq.s32.totalorder %s21, 1
    %p86 = por %p84, %p85
    %p88 = scmp.ne.s32.totalorder %s71, %s87
    %p89 = scmp.eq.s32.totalorder %s21, 0
    %p90 = por %p88, %p89
    %s91 = ssub.s32 %s22, %s34
    %p92 = scmp.eq.s32.totalorder %s91, 0
    %s94 = sadd.s32 %s93, 1
    %s95 = scalar_select %p92, %s93, %s94
    %p98 = pneg %p92
    %p99 = scmp.eq.s32.totalorder %s15, 1
    %p100 = por %p98, %p99
    %p101 = scmp.ne.s32.totalorder %s93, %s96
    %p102 = scmp.eq.s32.totalorder %s15, 0
    %p103 = por %p101, %p102
    %p104 = scmp.ne.s32.totalorder %s93, %s96
    %p105 = scmp.eq.s32.totalorder %s20, 1
    %p106 = por %p104, %p105
    %p107 = scmp.ne.s32.totalorder %s96, %s97
    %p108 = scmp.eq.s32.totalorder %s20, 0
    %p109 = por %p107, %p108
    %p110 = scmp.ne.s32.totalorder %s96, %s97
    %p111 = scmp.eq.s32.totalorder %s21, 1
    %p112 = por %p110, %p111
    %p114 = scmp.ne.s32.totalorder %s97, %s113
    %p115 = scmp.eq.s32.totalorder %s21, 0
    %p116 = por %p114, %p115
    %s117 = ssub.s32 %s22, %s34
    %p118 = scmp.eq.s32.totalorder %s117, 0
    %s120 = sadd.s32 %s119, 1
    %s121 = scalar_select %p118, %s119, %s120
    %p124 = pneg %p118
    %p125 = scmp.eq.s32.totalorder %s15, 1
    %p126 = por %p124, %p125
    %p127 = scmp.ne.s32.totalorder %s119, %s122
    %p128 = scmp.eq.s32.totalorder %s15, 0
    %p129 = por %p127, %p128
    %p130 = scmp.ne.s32.totalorder %s119, %s122
    %p131 = scmp.eq.s32.totalorder %s20, 1
    %p132 = por %p130, %p131
    %p133 = scmp.ne.s32.totalorder %s122, %s123
    %p134 = scmp.eq.s32.totalorder %s20, 0
    %p135 = por %p133, %p134
    %p136 = scmp.ne.s32.totalorder %s122, %s123
    %p137 = scmp.eq.s32.totalorder %s21, 1
    %p138 = por %p136, %p137
    %p140 = scmp.ne.s32.totalorder %s123, %s139
    %p141 = scmp.eq.s32.totalorder %s21, 0
    %p142 = por %p140, %p141
    %s143 = ssub.s32 %s22, %s34
    %p144 = scmp.eq.s32.totalorder %s143, 0
    %s146 = sadd.s32 %s145, 1
    %s147 = scalar_select %p144, %s145, %s146
    %p150 = pneg %p144
    %p151 = scmp.eq.s32.totalorder %s15, 1
    %p152 = por %p150, %p151
    %p153 = scmp.ne.s32.totalorder %s145, %s148
    %p154 = scmp.eq.s32.totalorder %s15, 0
    %p155 = por %p153, %p154
    %p156 = scmp.ne.s32.totalorder %s145, %s148
    %p157 = scmp.eq.s32.totalorder %s20, 1
    %p158 = por %p156, %p157
    %p159 = scmp.ne.s32.totalorder %s148, %s149
    %p160 = scmp.eq.s32.totalorder %s20, 0
    %p161 = por %p159, %p160
    %p162 = scmp.ne.s32.totalorder %s148, %s149
    %p163 = scmp.eq.s32.totalorder %s21, 1
    %p164 = por %p162, %p163
    %p166 = scmp.ne.s32.totalorder %s149, %s165
    %p167 = scmp.eq.s32.totalorder %s21, 0
    %p168 = por %p166, %p167
    %s170 = sadd.s32 %s169, 1
    %p173 = scmp.eq.s32.totalorder %s15, 1
    %p174 = scmp.ne.s32.totalorder %s169, %s171
    %p175 = scmp.eq.s32.totalorder %s15, 0
    %p176 = por %p174, %p175
    %p177 = scmp.ne.s32.totalorder %s169, %s171
    %p178 = scmp.eq.s32.totalorder %s20, 1
    %p179 = por %p177, %p178
    %p180 = scmp.ne.s32.totalorder %s171, %s172
    %p181 = scmp.eq.s32.totalorder %s20, 0
    %p182 = por %p180, %p181
    %p183 = scmp.ne.s32.totalorder %s171, %s172
    %p184 = scmp.eq.s32.totalorder %s21, 1
    %p185 = por %p183, %p184
    %p187 = scmp.ne.s32.totalorder %s172, %s186
    %p188 = scmp.eq.s32.totalorder %s21, 0
    %p189 = por %p187, %p188
    %s191 = sadd.s32 %s190, 1
    %p194 = scmp.eq.s32.totalorder %s15, 1
    %p195 = scmp.ne.s32.totalorder %s190, %s192
    %p196 = scmp.eq.s32.totalorder %s15, 0
    %p197 = por %p195, %p196
    %p198 = scmp.ne.s32.totalorder %s190, %s192
    %p199 = scmp.eq.s32.totalorder %s20, 1
    %p200 = por %p198, %p199
    %p201 = scmp.ne.s32.totalorder %s192, %s193
    %p202 = scmp.eq.s32.totalorder %s20, 0
    %p203 = por %p201, %p202
    %p204 = scmp.ne.s32.totalorder %s192, %s193
    %p205 = scmp.eq.s32.totalorder %s21, 1
    %p206 = por %p204, %p205
    %p208 = scmp.ne.s32.totalorder %s193, %s207
    %p209 = scmp.eq.s32.totalorder %s21, 0
    %p210 = por %p208, %p209
    %s211 = ssub.s32 %s22, %s34
    %s212 = ssub.s32 %s23, %s30
    %s213 = sor.u32 %s211, %s212
    %p214 = scmp.eq.s32.totalorder %s213, 0
    %s216 = sadd.s32 %s215, 1
    %s217 = scalar_select %p214, %s215, %s216
    %p220 = pneg %p214
    %p221 = scmp.eq.s32.totalorder %s15, 1
    %p222 = por %p220, %p221
    %p223 = scmp.ne.s32.totalorder %s215, %s218
    %p224 = scmp.eq.s32.totalorder %s15, 0
    %p225 = por %p223, %p224
    %p226 = scmp.ne.s32.totalorder %s215, %s218
    %p227 = scmp.eq.s32.totalorder %s20, 1
    %p228 = por %p226, %p227
    %p229 = scmp.ne.s32.totalorder %s218, %s219
    %p230 = scmp.eq.s32.totalorder %s20, 0
    %p231 = por %p229, %p230
    %p232 = scmp.ne.s32.totalorder %s218, %s219
    %p233 = scmp.eq.s32.totalorder %s21, 1
    %p234 = por %p232, %p233
    %p236 = scmp.ne.s32.totalorder %s219, %s235
    %p237 = scmp.eq.s32.totalorder %s21, 0
    %p238 = por %p236, %p237
    %s239 = ssub.s32 %s22, %s34
    %s240 = ssub.s32 %s23, %s30
    %s241 = sor.u32 %s239, %s240
    %p242 = scmp.eq.s32.totalorder %s241, 0
    %s244 = sadd.s32 %s243, 1
    %s245 = scalar_select %p242, %s243, %s244
    %p248 = pneg %p242
    %p249 = scmp.eq.s32.totalorder %s15, 1
    %p250 = por %p248, %p249
    %p251 = scmp.ne.s32.totalorder %s243, %s246
    %p252 = scmp.eq.s32.totalorder %s15, 0
    %p253 = por %p251, %p252
    %p254 = scmp.ne.s32.totalorder %s243, %s246
    %p255 = scmp.eq.s32.totalorder %s20, 1
    %p256 = por %p254, %p255
    %p257 = scmp.ne.s32.totalorder %s246, %s247
    %p258 = scmp.eq.s32.totalorder %s20, 0
    %p259 = por %p257, %p258
    %p260 = scmp.ne.s32.totalorder %s246, %s247
    %p261 = scmp.eq.s32.totalorder %s21, 1
    %p262 = por %p260, %p261
    %p264 = scmp.ne.s32.totalorder %s247, %s263
    %p265 = scmp.eq.s32.totalorder %s21, 0
    %p266 = por %p264, %p265
    %p267 = scmp.le.s32.totalorder 1, %s15
    %p268 = scmp.lt.s32.totalorder %s15, 3
    %p269 = pnand %p267, %p268
    %p270 = pneg %p269
    // Predicated region
    $region9: #{closed_call.11} parent=5 // pred_check
      _
    $region10: #{closed_call.11} parent=5 // pred_check_branch
      %272 = sbr.rel (%p269) target = $region12
    $region11: #{closed_call.11} parent=5 // pred_region
      %s273 = ssub.s32 %s15, 1
      // Predicated region
      $region13: #{closed_call.11} parent=11 // pred_check
        %p274 = pneg %p182
      $region14: #{closed_call.11} parent=11 // pred_check_branch
        %276 = sbr.rel (%p274) target = $region16
      $region15: #{closed_call.11} parent=11 // pred_region
        _
      $region16: #{closed_call.11} parent=11 // pred_fallthru
        _
      // Predicated region
      $region17: #{closed_call.11} parent=11 // pred_check
        %p277 = pneg %p203
      $region18: #{closed_call.11} parent=11 // pred_check_branch
        %279 = sbr.rel (%p277) target = $region20
      $region19: #{closed_call.11} parent=11 // pred_region
        _
      $region20: #{closed_call.11} parent=11 // pred_fallthru
        _
    $region12: #{closed_call.11} parent=5 // pred_fallthru
      _
    %p280 = scmp.lt.s32.totalorder %s15, 2
    // Predicated region
    $region21: #{closed_call.11} parent=5 // pred_check
      %p281 = pneg %p280
    $region22: #{closed_call.11} parent=5 // pred_check_branch
      %283 = sbr.rel (%p281) target = $region24
    $region23: #{closed_call.11} parent=5 // pred_region
      // Predicated region
      $region25: #{closed_call.11} parent=23 // pred_check
        %p284 = pneg %p49
      $region26: #{closed_call.11} parent=23 // pred_check_branch
        %286 = sbr.rel (%p284) target = $region28
      $region27: #{closed_call.11} parent=23 // pred_region
        %p287 = scmp.lt.s32.totalorder %s22, 1
        %s288 = scalar_select %p287, %s22, 1
        %p289 = scmp.lt.s32.totalorder %s23, 0
        %s290 = scalar_select %p289, %s23, 0
        %s291 = sadd.s32 %s290, %s288
        %s292 = smul.addr %s291, 8
        %s293 = scalar_lea.vmem %s0, %s292
      $region28: #{closed_call.11} parent=23 // pred_fallthru
        _
      // Predicated region
      $region29: #{closed_call.11} parent=23 // pred_check
        %p294 = pneg %p77
      $region30: #{closed_call.11} parent=23 // pred_check_branch
        %296 = sbr.rel (%p294) target = $region32
      $region31: #{closed_call.11} parent=23 // pred_region
        %p297 = scmp.lt.s32.totalorder %s22, 1
        %s298 = scalar_select %p297, %s22, 1
        %p299 = scmp.lt.s32.totalorder %s23, 0
        %s300 = scalar_select %p299, %s23, 0
        %s301 = smul.addr %s298, 4
        %s302 = sadd.s32 %s300, %s301
        %s303 = smul.addr %s302, 4
        %s304 = scalar_lea.vmem %s1, %s303
      $region32: #{closed_call.11} parent=23 // pred_fallthru
        _
      // Predicated region
      $region33: #{closed_call.11} parent=23 // pred_check
        %p305 = pneg %p103
      $region34: #{closed_call.11} parent=23 // pred_check_branch
        %307 = sbr.rel (%p305) target = $region36
      $region35: #{closed_call.11} parent=23 // pred_region
        %p308 = scmp.lt.s32.totalorder %s22, 1
        %s309 = scalar_select %p308, %s22, 1
        %s310 = smul.addr %s309, 4
        %s311 = smul.addr %s310, 4
        %s312 = scalar_lea.vmem %s2, %s311
      $region36: #{closed_call.11} parent=23 // pred_fallthru
        _
      // Predicated region
      $region37: #{closed_call.11} parent=23 // pred_check
        %p313 = pneg %p129
      $region38: #{closed_call.11} parent=23 // pred_check_branch
        %315 = sbr.rel (%p313) target = $region40
      $region39: #{closed_call.11} parent=23 // pred_region
        %p316 = scmp.lt.s32.totalorder %s22, 1
        %s317 = scalar_select %p316, %s22, 1
        %s318 = smul.addr %s317, 4
        %s319 = smul.addr %s318, 4
        %s320 = scalar_lea.vmem %s3, %s319
      $region40: #{closed_call.11} parent=23 // pred_fallthru
        _
      // Predicated region
      $region41: #{closed_call.11} parent=23 // pred_check
        %p321 = pneg %p155
      $region42: #{closed_call.11} parent=23 // pred_check_branch
        %323 = sbr.rel (%p321) target = $region44
      $region43: #{closed_call.11} parent=23 // pred_region
        %p324 = scmp.lt.s32.totalorder %s22, 1
        %s325 = scalar_select %p324, %s22, 1
        %s326 = scalar_lea.vmem %s4, %s325
      $region44: #{closed_call.11} parent=23 // pred_fallthru
        _
    $region24: #{closed_call.11} parent=5 // pred_fallthru
      _
    %p327 = scmp.le.s32.totalorder 1, %s15
    %p328 = scmp.lt.s32.totalorder %s15, 3
    %p329 = pnand %p327, %p328
    %p330 = pneg %p329
    // Predicated region
    $region45: #{closed_call.11} parent=5 // pred_check
      _
    $region46: #{closed_call.11} parent=5 // pred_check_branch
      %332 = sbr.rel (%p329) target = $region48
    $region47: #{closed_call.11} parent=5 // pred_region
      %s333 = ssub.s32 %s15, 1
      %p334 = scmp.lt.s32.totalorder %s24, 1
      %s335 = scalar_select %p334, %s24, 1
      %p336 = scmp.lt.s32.totalorder %s25, 0
      %s337 = scalar_select %p336, %s25, 0
      %s338 = sadd.s32 %s337, %s335
      %s339 = smul.addr %s338, 8
      %s340 = scalar_lea.vmem %s0, %s339
      %p341 = pneg %p55
      %p342 = pneg %p52
      %p343 = scmp.lt.s32.totalorder %s24, 1
      %s344 = scalar_select %p343, %s24, 1
      %p345 = scmp.lt.s32.totalorder %s25, 0
      %s346 = scalar_select %p345, %s25, 0
      %s347 = smul.addr %s344, 4
      %s348 = sadd.s32 %s346, %s347
      %s349 = smul.addr %s348, 4
      %s350 = scalar_lea.vmem %s1, %s349
      %p351 = pneg %p83
      %p352 = pneg %p80
      %p353 = scmp.lt.s32.totalorder %s24, 1
      %s354 = scalar_select %p353, %s24, 1
      %s355 = smul.addr %s354, 4
      %s356 = smul.addr %s355, 4
      %s357 = scalar_lea.vmem %s2, %s356
      %p358 = pneg %p109
      %p359 = pneg %p106
      %p360 = scmp.lt.s32.totalorder %s24, 1
      %s361 = scalar_select %p360, %s24, 1
      %s362 = smul.addr %s361, 4
      %s363 = smul.addr %s362, 4
      %s364 = scalar_lea.vmem %s3, %s363
      %p365 = pneg %p135
      %p366 = pneg %p132
      %p367 = scmp.lt.s32.totalorder %s24, 1
      %s368 = scalar_select %p367, %s24, 1
      %s369 = scalar_lea.vmem %s4, %s368
      %p370 = pneg %p161
      %p371 = pneg %p158
      %p372 = pneg %p182
      %p373 = pneg %p179
      %p374 = pneg %p203
      %p375 = pneg %p200
      %p376 = pneg %p231
      %p377 = pneg %p228
      %p378 = scmp.lt.s32.totalorder %s24, 1
      %s379 = scalar_select %p378, %s24, 1
      %p380 = scmp.lt.s32.totalorder %s25, 0
      %s381 = scalar_select %p380, %s25, 0
      %s382 = sadd.s32 %s381, %s379
      %s383 = smul.addr %s382, 8
      %s384 = scalar_lea.vmem %s7, %s383
      %p385 = pneg %p259
      %p386 = pneg %p256
      %p387 = scmp.lt.s32.totalorder %s24, 1
      %s388 = scalar_select %p387, %s24, 1
      %p389 = scmp.lt.s32.totalorder %s25, 0
      %s390 = scalar_select %p389, %s25, 0
      %s391 = smul.addr %s388, 4
      %s392 = sadd.s32 %s390, %s391
      %s393 = smul.addr %s392, 4
      %s394 = scalar_lea.vmem %s8, %s393
      %p395 = scmp.lt.s32.totalorder %s24, 1
      %s396 = scalar_select %p395, %s24, 1
      %p397 = scmp.lt.s32.totalorder %s25, 0
      %s398 = scalar_select %p397, %s25, 0
      %s399 = sadd.s32 %s398, %s396
      %s400 = smul.addr %s399, 8
      %s401 = scalar_lea.vmem %s0, %s400
      %p402 = scmp.lt.s32.totalorder %s24, 1
      %s403 = scalar_select %p402, %s24, 1
      %p404 = scmp.lt.s32.totalorder %s25, 0
      %s405 = scalar_select %p404, %s25, 0
      %s406 = smul.addr %s403, 4
      %s407 = sadd.s32 %s405, %s406
      %s408 = smul.addr %s407, 4
      %s409 = scalar_lea.vmem %s1, %s408
      %p410 = scmp.lt.s32.totalorder %s24, 1
      %s411 = scalar_select %p410, %s24, 1
      %s412 = smul.addr %s411, 4
      %s413 = smul.addr %s412, 4
      %s414 = scalar_lea.vmem %s2, %s413
      %p415 = scmp.lt.s32.totalorder %s24, 1
      %s416 = scalar_select %p415, %s24, 1
      %s417 = smul.addr %s416, 4
      %s418 = smul.addr %s417, 4
      %s419 = scalar_lea.vmem %s3, %s418
      %p420 = scmp.lt.s32.totalorder %s24, 1
      %s421 = scalar_select %p420, %s24, 1
      %s422 = scalar_lea.vmem %s4, %s421
      %p423 = scmp.lt.s32.totalorder %s24, 1
      %s424 = scalar_select %p423, %s24, 1
      %p425 = scmp.lt.s32.totalorder %s25, 0
      %s426 = scalar_select %p425, %s25, 0
      %s427 = sadd.s32 %s426, %s424
      %s428 = smul.addr %s427, 8
      %s429 = scalar_lea.vmem %s7, %s428
      %p430 = scmp.lt.s32.totalorder %s24, 1
      %s431 = scalar_select %p430, %s24, 1
      %p432 = scmp.lt.s32.totalorder %s25, 0
      %s433 = scalar_select %p432, %s25, 0
      %s434 = smul.addr %s431, 4
      %s435 = sadd.s32 %s433, %s434
      %s436 = smul.addr %s435, 4
      %s437 = scalar_lea.vmem %s8, %s436
      %v439 = vld [vmem:[%s401] sm:$0xff]
      %v440 = vld [vmem:[%s422] sm:$0x1]
      %v441 = vld [vmem:[%s409] sm:$0xf]
      %v442 = vld [vmem:[%s414] sm:$0xf]
      %v443 = vld [vmem:[%s419] sm:$0xf]
      %v445 = vlaneseq
      %v446 = vshrl.u32 %v445, 7
      %v447 = vsub.s32 0, %v446
      %v448 = vrot.slane %v440, %v447
      %vm450 = vcmask 64512
      %v452 = vsel %vm450, %v441, 0
      %v455 = vsel %vm450, %v442, 0
      %457 = vmatprep.subr.bf16.mxu0 0
      %458 = vmatpush1.bf16.xpose.msra.mxu0 0
      %459 = vmatprep.subr.bf16.mxu0 0
      %460 = vmatpush1.bf16.xpose.msra.mxu0 0
      %461 = vmatprep.subr.bf16.mxu0 0
      %462 = vmatpush1.bf16.xpose.msra.mxu0 0
      %463 = vmatprep.subr.bf16.mxu0 0
      %464 = vmatpush1.bf16.xpose.msra.mxu0 0
      %465 = vmatprep.subr.bf16.mxu0 0
      %466 = vmatpush1.bf16.xpose.msra.mxu0 0
      %467 = vmatprep.subr.bf16.mxu0 0
      %468 = vmatpush1.bf16.xpose.msra.mxu0 0
      %469 = vmatprep.subr.bf16.mxu0 0
      %470 = vmatpush1.bf16.xpose.msra.mxu0 0
      %471 = vmatprep.subr.bf16.mxu0 0
      %472 = vmatpush1.bf16.xpose.msra.mxu0 %v455
      %473 = vmatprep.subr.bf16.mxu0 0
      %474 = vmatpush2.bf16.xpose.msra.mxu0 0
      %475 = vmatprep.subr.bf16.mxu0 0
      %476 = vmatpush2.bf16.xpose.msra.mxu0 0
      %477 = vmatprep.subr.bf16.mxu0 0
      %478 = vmatpush2.bf16.xpose.msra.mxu0 0
      %479 = vmatprep.subr.bf16.mxu0 0
      %480 = vmatpush2.bf16.xpose.msra.mxu0 0
      %481 = vmatprep.subr.bf16.mxu0 0
      %482 = vmatpush2.bf16.xpose.msra.mxu0 0
      %483 = vmatprep.subr.bf16.mxu0 0
      %484 = vmatpush2.bf16.xpose.msra.mxu0 0
      %485 = vmatprep.subr.bf16.mxu0 0
      %486 = vmatpush2.bf16.xpose.msra.mxu0 0
      %487 = vmatprep.subr.bf16.mxu0 0
      %488 = vmatpush2.bf16.xpose.msra.mxu0 0
      %489 = vmatprep.mubr.bf16.mxu0 0
      %490 = vmatmul.mubr.bf16.gmra.mxu0 %v452
      %v491 = vpop.f32.mrf.mxu0
      %v492 = vadd.f32 %v448, %v491
      %v493 = vpop.f32.mrf.mxu0
      %v494 = vpop.f32.mrf.mxu0
      %v495 = vpop.f32.mrf.mxu0
      %496 = vdwg.mxu0
      %v497 = vsel %vm450, %v492, -inf
      %498 = vmax.xlane.f32.xlu0 %v497
      %v499 = vpop.xlane.xlu0 %498
      %v500 = vsub.f32 %v492, %v499
      %v501 = vmul.f32 %v500, 1.442695
      %v502 = vpow.pop %v501
      %v503 = vsel %vm450, %v502, 0.0
      %504 = vadd.xlane.f32.xlu0 %v503
      %v505 = vpop.xlane.xlu0 %504
      %v506 = vrcp.pop %v505
      %v507 = vmul.f32 1.0, %v506
      %v508 = vmul.f32 %v502, %v507
      %v509 = vpack.c.bf16 %v508, %v508
      %vm510 = vcmask 60416
      %511 = vst.msk [vmem:[%s437] sm:$0xf] %vm510, %v509
      %v513 = vsel %vm450, %v509, 0
      %vm515 = vcmask 1043456
      %v517 = vsel %vm515, %v443, 0
      %519 = vmatprep.subr.bf16.mxu0 0
      %520 = vmatpush1.bf16.msra.mxu0 0
      %521 = vmatprep.subr.bf16.mxu0 0
      %522 = vmatpush1.bf16.msra.mxu0 0
      %523 = vmatprep.subr.bf16.mxu0 0
      %524 = vmatpush1.bf16.msra.mxu0 0
      %525 = vmatprep.subr.bf16.mxu0 0
      %526 = vmatpush1.bf16.msra.mxu0 0
      %527 = vmatprep.subr.bf16.mxu0 0
      %528 = vmatpush1.bf16.msra.mxu0 0
      %529 = vmatprep.subr.bf16.mxu0 0
      %530 = vmatpush1.bf16.msra.mxu0 0
      %531 = vmatprep.subr.bf16.mxu0 0
      %532 = vmatpush1.bf16.msra.mxu0 0
      %533 = vmatprep.subr.bf16.mxu0 0
      %534 = vmatpush1.bf16.msra.mxu0 %v517
      %535 = vmatprep.subr.bf16.mxu0 0
      %536 = vmatpush2.bf16.msra.mxu0 0
      %537 = vmatprep.subr.bf16.mxu0 0
      %538 = vmatpush2.bf16.msra.mxu0 0
      %539 = vmatprep.subr.bf16.mxu0 0
      %540 = vmatpush2.bf16.msra.mxu0 0
      %541 = vmatprep.subr.bf16.mxu0 0
      %542 = vmatpush2.bf16.msra.mxu0 0
      %543 = vmatprep.subr.bf16.mxu0 0
      %544 = vmatpush2.bf16.msra.mxu0 0
      %545 = vmatprep.subr.bf16.mxu0 0
      %546 = vmatpush2.bf16.msra.mxu0 0
      %547 = vmatprep.subr.bf16.mxu0 0
      %548 = vmatpush2.bf16.msra.mxu0 0
      %549 = vmatprep.subr.bf16.mxu0 0
      %550 = vmatpush2.bf16.msra.mxu0 0
      %551 = vmatprep.mubr.bf16.mxu0 0
      %552 = vmatmul.mubr.bf16.gmra.mxu0 %v513
      %v553 = vpop.f32.mrf.mxu0
      %v554 = vadd.f32 0.0, %v553
      %v555 = vpop.f32.mrf.mxu0
      %v556 = vpop.f32.mrf.mxu0
      %v557 = vpop.f32.mrf.mxu0
      %558 = vdwg.mxu0
      %s559 = scalar_lea.vmem %s409, 4
      %v560 = vld [vmem:[%s559] sm:$0xf]
      %s561 = scalar_lea.vmem %s414, 4
      %v562 = vld [vmem:[%s561] sm:$0xf]
      %s563 = scalar_lea.vmem %s419, 4
      %v564 = vld [vmem:[%s563] sm:$0xf]
      %v566 = vsel %vm450, %v560, 0
      %v569 = vsel %vm450, %v562, 0
      %571 = vmatprep.subr.bf16.mxu0 0
      %572 = vmatpush1.bf16.xpose.msra.mxu0 0
      %573 = vmatprep.subr.bf16.mxu0 0
      %574 = vmatpush1.bf16.xpose.msra.mxu0 0
      %575 = vmatprep.subr.bf16.mxu0 0
      %576 = vmatpush1.bf16.xpose.msra.mxu0 0
      %577 = vmatprep.subr.bf16.mxu0 0
      %578 = vmatpush1.bf16.xpose.msra.mxu0 0
      %579 = vmatprep.subr.bf16.mxu0 0
      %580 = vmatpush1.bf16.xpose.msra.mxu0 0
      %581 = vmatprep.subr.bf16.mxu0 0
      %582 = vmatpush1.bf16.xpose.msra.mxu0 0
      %583 = vmatprep.subr.bf16.mxu0 0
      %584 = vmatpush1.bf16.xpose.msra.mxu0 0
      %585 = vmatprep.subr.bf16.mxu0 0
      %586 = vmatpush1.bf16.xpose.msra.mxu0 %v569
      %587 = vmatprep.subr.bf16.mxu0 0
      %588 = vmatpush2.bf16.xpose.msra.mxu0 0
      %589 = vmatprep.subr.bf16.mxu0 0
      %590 = vmatpush2.bf16.xpose.msra.mxu0 0
      %591 = vmatprep.subr.bf16.mxu0 0
      %592 = vmatpush2.bf16.xpose.msra.mxu0 0
      %593 = vmatprep.subr.bf16.mxu0 0
      %594 = vmatpush2.bf16.xpose.msra.mxu0 0
      %595 = vmatprep.subr.bf16.mxu0 0
      %596 = vmatpush2.bf16.xpose.msra.mxu0 0
      %597 = vmatprep.subr.bf16.mxu0 0
      %598 = vmatpush2.bf16.xpose.msra.mxu0 0
      %599 = vmatprep.subr.bf16.mxu0 0
      %600 = vmatpush2.bf16.xpose.msra.mxu0 0
      %601 = vmatprep.subr.bf16.mxu0 0
      %602 = vmatpush2.bf16.xpose.msra.mxu0 0
      %603 = vmatprep.mubr.bf16.mxu0 0
      %604 = vmatmul.mubr.bf16.gmra.mxu0 %v566
      %v605 = vpop.f32.mrf.mxu0
      %v606 = vadd.f32 %v448, %v605
      %v607 = vpop.f32.mrf.mxu0
      %v608 = vpop.f32.mrf.mxu0
      %v609 = vpop.f32.mrf.mxu0
      %610 = vdwg.mxu0
      %v611 = vsel %vm450, %v606, -inf
      %612 = vmax.xlane.f32.xlu0 %v611
      %v613 = vpop.xlane.xlu0 %612
      %v614 = vsub.f32 %v606, %v613
      %v615 = vmul.f32 %v614, 1.442695
      %v616 = vpow.pop %v615
      %v617 = vsel %vm450, %v616, 0.0
      %618 = vadd.xlane.f32.xlu0 %v617
      %v619 = vpop.xlane.xlu0 %618
      %v620 = vrcp.pop %v619
      %v621 = vmul.f32 1.0, %v620
      %v622 = vmul.f32 %v616, %v621
      %v623 = vpack.c.bf16 %v622, %v622
      %s624 = scalar_lea.vmem %s437, 4
      %625 = vst.msk [vmem:[%s624] sm:$0xf] %vm510, %v623
      %v627 = vsel %vm450, %v623, 0
      %v630 = vsel %vm515, %v564, 0
      %632 = vmatprep.subr.bf16.mxu0 0
      %633 = vmatpush1.bf16.msra.mxu0 0
      %634 = vmatprep.subr.bf16.mxu0 0
      %635 = vmatpush1.bf16.msra.mxu0 0
      %636 = vmatprep.subr.bf16.mxu0 0
      %637 = vmatpush1.bf16.msra.mxu0 0
      %638 = vmatprep.subr.bf16.mxu0 0
      %639 = vmatpush1.bf16.msra.mxu0 0
      %640 = vmatprep.subr.bf16.mxu0 0
      %641 = vmatpush1.bf16.msra.mxu0 0
      %642 = vmatprep.subr.bf16.mxu0 0
      %643 = vmatpush1.bf16.msra.mxu0 0
      %644 = vmatprep.subr.bf16.mxu0 0
      %645 = vmatpush1.bf16.msra.mxu0 0
      %646 = vmatprep.subr.bf16.mxu0 0
      %647 = vmatpush1.bf16.msra.mxu0 %v630
      %648 = vmatprep.subr.bf16.mxu0 0
      %649 = vmatpush2.bf16.msra.mxu0 0
      %650 = vmatprep.subr.bf16.mxu0 0
      %651 = vmatpush2.bf16.msra.mxu0 0
      %652 = vmatprep.subr.bf16.mxu0 0
      %653 = vmatpush2.bf16.msra.mxu0 0
      %654 = vmatprep.subr.bf16.mxu0 0
      %655 = vmatpush2.bf16.msra.mxu0 0
      %656 = vmatprep.subr.bf16.mxu0 0
      %657 = vmatpush2.bf16.msra.mxu0 0
      %658 = vmatprep.subr.bf16.mxu0 0
      %659 = vmatpush2.bf16.msra.mxu0 0
      %660 = vmatprep.subr.bf16.mxu0 0
      %661 = vmatpush2.bf16.msra.mxu0 0
      %662 = vmatprep.subr.bf16.mxu0 0
      %663 = vmatpush2.bf16.msra.mxu0 0
      %664 = vmatprep.mubr.bf16.mxu0 0
      %665 = vmatmul.mubr.bf16.gmra.mxu0 %v627
      %v666 = vpop.f32.mrf.mxu0
      %v667 = vadd.f32 0.0, %v666
      %v668 = vpop.f32.mrf.mxu0
      %v669 = vpop.f32.mrf.mxu0
      %v670 = vpop.f32.mrf.mxu0
      %671 = vdwg.mxu0
      %s672 = scalar_lea.vmem %s409, 8
      %v673 = vld [vmem:[%s672] sm:$0xf]
      %s674 = scalar_lea.vmem %s414, 8
      %v675 = vld [vmem:[%s674] sm:$0xf]
      %s676 = scalar_lea.vmem %s419, 8
      %v677 = vld [vmem:[%s676] sm:$0xf]
      %v679 = vsel %vm450, %v673, 0
      %v682 = vsel %vm450, %v675, 0
      %684 = vmatprep.subr.bf16.mxu0 0
      %685 = vmatpush1.bf16.xpose.msra.mxu0 0
      %686 = vmatprep.subr.bf16.mxu0 0
      %687 = vmatpush1.bf16.xpose.msra.mxu0 0
      %688 = vmatprep.subr.bf16.mxu0 0
      %689 = vmatpush1.bf16.xpose.msra.mxu0 0
      %690 = vmatprep.subr.bf16.mxu0 0
      %691 = vmatpush1.bf16.xpose.msra.mxu0 0
      %692 = vmatprep.subr.bf16.mxu0 0
      %693 = vmatpush1.bf16.xpose.msra.mxu0 0
      %694 = vmatprep.subr.bf16.mxu0 0
      %695 = vmatpush1.bf16.xpose.msra.mxu0 0
      %696 = vmatprep.subr.bf16.mxu0 0
      %697 = vmatpush1.bf16.xpose.msra.mxu0 0
      %698 = vmatprep.subr.bf16.mxu0 0
      %699 = vmatpush1.bf16.xpose.msra.mxu0 %v682
      %700 = vmatprep.subr.bf16.mxu0 0
      %701 = vmatpush2.bf16.xpose.msra.mxu0 0
      %702 = vmatprep.subr.bf16.mxu0 0
      %703 = vmatpush2.bf16.xpose.msra.mxu0 0
      %704 = vmatprep.subr.bf16.mxu0 0
      %705 = vmatpush2.bf16.xpose.msra.mxu0 0
      %706 = vmatprep.subr.bf16.mxu0 0
      %707 = vmatpush2.bf16.xpose.msra.mxu0 0
      %708 = vmatprep.subr.bf16.mxu0 0
      %709 = vmatpush2.bf16.xpose.msra.mxu0 0
      %710 = vmatprep.subr.bf16.mxu0 0
      %711 = vmatpush2.bf16.xpose.msra.mxu0 0
      %712 = vmatprep.subr.bf16.mxu0 0
      %713 = vmatpush2.bf16.xpose.msra.mxu0 0
      %714 = vmatprep.subr.bf16.mxu0 0
      %715 = vmatpush2.bf16.xpose.msra.mxu0 0
      %716 = vmatprep.mubr.bf16.mxu0 0
      %717 = vmatmul.mubr.bf16.gmra.mxu0 %v679
      %v718 = vpop.f32.mrf.mxu0
      %v719 = vadd.f32 %v448, %v718
      %v720 = vpop.f32.mrf.mxu0
      %v721 = vpop.f32.mrf.mxu0
      %v722 = vpop.f32.mrf.mxu0
      %723 = vdwg.mxu0
      %v724 = vsel %vm450, %v719, -inf
      %725 = vmax.xlane.f32.xlu0 %v724
      %v726 = vpop.xlane.xlu0 %725
      %v727 = vsub.f32 %v719, %v726
      %v728 = vmul.f32 %v727, 1.442695
      %v729 = vpow.pop %v728
      %v730 = vsel %vm450, %v729, 0.0
      %731 = vadd.xlane.f32.xlu0 %v730
      %v732 = vpop.xlane.xlu0 %731
      %v733 = vrcp.pop %v732
      %v734 = vmul.f32 1.0, %v733
      %v735 = vmul.f32 %v729, %v734
      %v736 = vpack.c.bf16 %v735, %v735
      %s737 = scalar_lea.vmem %s437, 8
      %738 = vst.msk [vmem:[%s737] sm:$0xf] %vm510, %v736
      %v740 = vsel %vm450, %v736, 0
      %v743 = vsel %vm515, %v677, 0
      %745 = vmatprep.subr.bf16.mxu0 0
      %746 = vmatpush1.bf16.msra.mxu0 0
      %747 = vmatprep.subr.bf16.mxu0 0
      %748 = vmatpush1.bf16.msra.mxu0 0
      %749 = vmatprep.subr.bf16.mxu0 0
      %750 = vmatpush1.bf16.msra.mxu0 0
      %751 = vmatprep.subr.bf16.mxu0 0
      %752 = vmatpush1.bf16.msra.mxu0 0
      %753 = vmatprep.subr.bf16.mxu0 0
      %754 = vmatpush1.bf16.msra.mxu0 0
      %755 = vmatprep.subr.bf16.mxu0 0
      %756 = vmatpush1.bf16.msra.mxu0 0
      %757 = vmatprep.subr.bf16.mxu0 0
      %758 = vmatpush1.bf16.msra.mxu0 0
      %759 = vmatprep.subr.bf16.mxu0 0
      %760 = vmatpush1.bf16.msra.mxu0 %v743
      %761 = vmatprep.subr.bf16.mxu0 0
      %762 = vmatpush2.bf16.msra.mxu0 0
      %763 = vmatprep.subr.bf16.mxu0 0
      %764 = vmatpush2.bf16.msra.mxu0 0
      %765 = vmatprep.subr.bf16.mxu0 0
      %766 = vmatpush2.bf16.msra.mxu0 0
      %767 = vmatprep.subr.bf16.mxu0 0
      %768 = vmatpush2.bf16.msra.mxu0 0
      %769 = vmatprep.subr.bf16.mxu0 0
      %770 = vmatpush2.bf16.msra.mxu0 0
      %771 = vmatprep.subr.bf16.mxu0 0
      %772 = vmatpush2.bf16.msra.mxu0 0
      %773 = vmatprep.subr.bf16.mxu0 0
      %774 = vmatpush2.bf16.msra.mxu0 0
      %775 = vmatprep.subr.bf16.mxu0 0
      %776 = vmatpush2.bf16.msra.mxu0 0
      %777 = vmatprep.mubr.bf16.mxu0 0
      %778 = vmatmul.mubr.bf16.gmra.mxu0 %v740
      %v779 = vpop.f32.mrf.mxu0
      %v780 = vadd.f32 0.0, %v779
      %v781 = vpop.f32.mrf.mxu0
      %v782 = vpop.f32.mrf.mxu0
      %v783 = vpop.f32.mrf.mxu0
      %784 = vdwg.mxu0
      %s785 = scalar_lea.vmem %s409, 12
      %v786 = vld [vmem:[%s785] sm:$0xf]
      %s787 = scalar_lea.vmem %s414, 12
      %v788 = vld [vmem:[%s787] sm:$0xf]
      %s789 = scalar_lea.vmem %s419, 12
      %v790 = vld [vmem:[%s789] sm:$0xf]
      %v792 = vsel %vm450, %v786, 0
      %v795 = vsel %vm450, %v788, 0
      %797 = vmatprep.subr.bf16.mxu0 0
      %798 = vmatpush1.bf16.xpose.msra.mxu0 0
      %799 = vmatprep.subr.bf16.mxu0 0
      %800 = vmatpush1.bf16.xpose.msra.mxu0 0
      %801 = vmatprep.subr.bf16.mxu0 0
      %802 = vmatpush1.bf16.xpose.msra.mxu0 0
      %803 = vmatprep.subr.bf16.mxu0 0
      %804 = vmatpush1.bf16.xpose.msra.mxu0 0
      %805 = vmatprep.subr.bf16.mxu0 0
      %806 = vmatpush1.bf16.xpose.msra.mxu0 0
      %807 = vmatprep.subr.bf16.mxu0 0
      %808 = vmatpush1.bf16.xpose.msra.mxu0 0
      %809 = vmatprep.subr.bf16.mxu0 0
      %810 = vmatpush1.bf16.xpose.msra.mxu0 0
      %811 = vmatprep.subr.bf16.mxu0 0
      %812 = vmatpush1.bf16.xpose.msra.mxu0 %v795
      %813 = vmatprep.subr.bf16.mxu0 0
      %814 = vmatpush2.bf16.xpose.msra.mxu0 0
      %815 = vmatprep.subr.bf16.mxu0 0
      %816 = vmatpush2.bf16.xpose.msra.mxu0 0
      %817 = vmatprep.subr.bf16.mxu0 0
      %818 = vmatpush2.bf16.xpose.msra.mxu0 0
      %819 = vmatprep.subr.bf16.mxu0 0
      %820 = vmatpush2.bf16.xpose.msra.mxu0 0
      %821 = vmatprep.subr.bf16.mxu0 0
      %822 = vmatpush2.bf16.xpose.msra.mxu0 0
      %823 = vmatprep.subr.bf16.mxu0 0
      %824 = vmatpush2.bf16.xpose.msra.mxu0 0
      %825 = vmatprep.subr.bf16.mxu0 0
      %826 = vmatpush2.bf16.xpose.msra.mxu0 0
      %827 = vmatprep.subr.bf16.mxu0 0
      %828 = vmatpush2.bf16.xpose.msra.mxu0 0
      %829 = vmatprep.mubr.bf16.mxu0 0
      %830 = vmatmul.mubr.bf16.gmra.mxu0 %v792
      %v831 = vpop.f32.mrf.mxu0
      %v832 = vadd.f32 %v448, %v831
      %v833 = vpop.f32.mrf.mxu0
      %v834 = vpop.f32.mrf.mxu0
      %v835 = vpop.f32.mrf.mxu0
      %836 = vdwg.mxu0
      %v837 = vsel %vm450, %v832, -inf
      %838 = vmax.xlane.f32.xlu0 %v837
      %v839 = vpop.xlane.xlu0 %838
      %v840 = vsub.f32 %v832, %v839
      %v841 = vmul.f32 %v840, 1.442695
      %v842 = vpow.pop %v841
      %v843 = vsel %vm450, %v842, 0.0
      %844 = vadd.xlane.f32.xlu0 %v843
      %v845 = vpop.xlane.xlu0 %844
      %v846 = vrcp.pop %v845
      %v847 = vmul.f32 1.0, %v846
      %v848 = vmul.f32 %v842, %v847
      %v849 = vpack.c.bf16 %v848, %v848
      %s850 = scalar_lea.vmem %s437, 12
      %851 = vst.msk [vmem:[%s850] sm:$0xf] %vm510, %v849
      %v853 = vsel %vm450, %v849, 0
      %v856 = vsel %vm515, %v790, 0
      %858 = vmatprep.subr.bf16.mxu0 0
      %859 = vmatpush1.bf16.msra.mxu0 0
      %860 = vmatprep.subr.bf16.mxu0 0
      %861 = vmatpush1.bf16.msra.mxu0 0
      %862 = vmatprep.subr.bf16.mxu0 0
      %863 = vmatpush1.bf16.msra.mxu0 0
      %864 = vmatprep.subr.bf16.mxu0 0
      %865 = vmatpush1.bf16.msra.mxu0 0
      %866 = vmatprep.subr.bf16.mxu0 0
      %867 = vmatpush1.bf16.msra.mxu0 0
      %868 = vmatprep.subr.bf16.mxu0 0
      %869 = vmatpush1.bf16.msra.mxu0 0
      %870 = vmatprep.subr.bf16.mxu0 0
      %871 = vmatpush1.bf16.msra.mxu0 0
      %872 = vmatprep.subr.bf16.mxu0 0
      %873 = vmatpush1.bf16.msra.mxu0 %v856
      %874 = vmatprep.subr.bf16.mxu0 0
      %875 = vmatpush2.bf16.msra.mxu0 0
      %876 = vmatprep.subr.bf16.mxu0 0
      %877 = vmatpush2.bf16.msra.mxu0 0
      %878 = vmatprep.subr.bf16.mxu0 0
      %879 = vmatpush2.bf16.msra.mxu0 0
      %880 = vmatprep.subr.bf16.mxu0 0
      %881 = vmatpush2.bf16.msra.mxu0 0
      %882 = vmatprep.subr.bf16.mxu0 0
      %883 = vmatpush2.bf16.msra.mxu0 0
      %884 = vmatprep.subr.bf16.mxu0 0
      %885 = vmatpush2.bf16.msra.mxu0 0
      %886 = vmatprep.subr.bf16.mxu0 0
      %887 = vmatpush2.bf16.msra.mxu0 0
      %888 = vmatprep.subr.bf16.mxu0 0
      %889 = vmatpush2.bf16.msra.mxu0 0
      %890 = vmatprep.mubr.bf16.mxu0 0
      %891 = vmatmul.mubr.bf16.gmra.mxu0 %v853
      %v892 = vpop.f32.mrf.mxu0
      %v893 = vadd.f32 0.0, %v892
      %v894 = vpop.f32.mrf.mxu0
      %v895 = vpop.f32.mrf.mxu0
      %v896 = vpop.f32.mrf.mxu0
      %897 = vdwg.mxu0
      %899 = vrot.lane.b32.xlu0 %v667, 8
      %v900 = vpop.permute.xlu0 %899
      %903 = vrot.lane.b32.xlu0 %v780, 16
      %v904 = vpop.permute.xlu0 %903
      %907 = vrot.lane.b32.xlu0 %v893, 24
      %v908 = vpop.permute.xlu0 %907
      %v910 = vsel %vm450, %v554, %v900
      %vm911 = vcmask 130048
      %v912 = vsel %vm911, %v910, %v904
      %vm913 = vcmask 195584
      %v914 = vsel %vm913, %v912, %v908
      %v915 = vpack.c.bf16 %v914, %v914
      %v916 = vld [vmem:[%s5] sm:$0xf]
      %v917 = vld [vmem:[%s5 + $0x4] sm:$0xf]
      %v918 = vld [vmem:[%s5 + $0x8] sm:$0xf]
      %v919 = vld [vmem:[%s5 + $0xc] sm:$0xf]
      %v920 = vld [vmem:[%s6] sm:$0x1]
      %v922 = vlaneseq
      %v923 = vshrl.u32 %v922, 7
      %v924 = vsub.s32 0, %v923
      %v925 = vrot.slane %v920, %v924
      %v931 = vunpack.c.l.b16 %v916
      %v932 = vunpack.c.l.b16 %v917
      %v933 = vunpack.c.l.b16 %v918
      %v934 = vunpack.c.l.b16 %v919
      %v935 = vpack.c.b16 %v932, %v931
      %v936 = vpack.c.b16 %v934, %v933
      %vm939 = vcmask 261120
      %v941 = vsel %vm939, %v915, 0
      %943 = vmatprep.subr.bf16.mxu0 0
      %944 = vmatpush1.bf16.msra.mxu0 0
      %945 = vmatprep.subr.bf16.mxu0 0
      %946 = vmatpush1.bf16.msra.mxu0 0
      %947 = vmatprep.subr.bf16.mxu0 0
      %948 = vmatpush1.bf16.msra.mxu0 0
      %949 = vmatprep.subr.bf16.mxu0 0
      %950 = vmatpush1.bf16.msra.mxu0 0
      %951 = vmatprep.subr.bf16.mxu0 0
      %952 = vmatpush1.bf16.msra.mxu0 0
      %953 = vmatprep.subr.bf16.mxu0 0
      %954 = vmatpush1.bf16.msra.mxu0 0
      %955 = vmatprep.subr.bf16.mxu0 0
      %956 = vmatpush1.bf16.msra.mxu0 %v936
      %957 = vmatprep.subr.bf16.mxu0 0
      %958 = vmatpush1.bf16.msra.mxu0 %v935
      %959 = vmatprep.subr.bf16.mxu0 0
      %960 = vmatpush2.bf16.msra.mxu0 0
      %961 = vmatprep.subr.bf16.mxu0 0
      %962 = vmatpush2.bf16.msra.mxu0 0
      %963 = vmatprep.subr.bf16.mxu0 0
      %964 = vmatpush2.bf16.msra.mxu0 0
      %965 = vmatprep.subr.bf16.mxu0 0
      %966 = vmatpush2.bf16.msra.mxu0 0
      %967 = vmatprep.subr.bf16.mxu0 0
      %968 = vmatpush2.bf16.msra.mxu0 0
      %969 = vmatprep.subr.bf16.mxu0 0
      %970 = vmatpush2.bf16.msra.mxu0 0
      %971 = vmatprep.subr.bf16.mxu0 0
      %972 = vmatpush2.bf16.msra.mxu0 0
      %973 = vmatprep.subr.bf16.mxu0 0
      %974 = vmatpush2.bf16.msra.mxu0 0
      %975 = vmatprep.mubr.bf16.mxu0 0
      %976 = vmatmul.mubr.bf16.gmra.mxu0 %v941
      %v977 = vpop.f32.mrf.mxu0
      %v978 = vadd.f32 %v925, %v977
      %v979 = vpop.f32.mrf.mxu0
      %v980 = vpop.f32.mrf.mxu0
      %v981 = vpop.f32.mrf.mxu0
      %982 = vdwg.mxu0
      %v983 = vadd.f32 %v439, %v978
      %v984 = vsel %vm939, %v983, 0.0
      %985 = vadd.xlane.f32.xlu0 %v984
      %v986 = vpop.xlane.xlu0 %985
      %v987 = vrcp.pop 32.0
      %v988 = vmul.f32 %v986, %v987
      %v989 = vsub.f32 %v983, %v988
      %v990 = vmul.f32 %v989, %v989
      %v991 = vsel %vm939, %v990, 0.0
      %992 = vadd.xlane.f32.xlu0 %v991
      %v993 = vpop.xlane.xlu0 %992
      %v994 = vmul.f32 %v993, %v987
      %v995 = vadd.f32 %v994, 1e-06
      %v996 = vrsqrt.pop %v995
      %v997 = vmul.f32 %v989, %v996
      %998 = vst.msk [vmem:[%s429] sm:$0xff] %vm939, %v997
      %p999 = scmp.lt.s32.totalorder %s24, 1
      %s1000 = scalar_select %p999, %s24, 1
      %p1001 = scmp.lt.s32.totalorder %s25, 0
      %s1002 = scalar_select %p1001, %s25, 0
      %s1003 = sadd.s32 %s1002, %s1000
      %s1004 = smul.addr %s1003, 8
      %s1005 = scalar_lea.vmem %s7, %s1004
      %p1006 = scmp.lt.s32.totalorder %s24, 1
      %s1007 = scalar_select %p1006, %s24, 1
      %p1008 = scmp.lt.s32.totalorder %s25, 0
      %s1009 = scalar_select %p1008, %s25, 0
      %s1010 = smul.addr %s1007, 4
      %s1011 = sadd.s32 %s1009, %s1010
      %s1012 = smul.addr %s1011, 4
      %s1013 = scalar_lea.vmem %s8, %s1012
      // Predicated region
      $region49: #{closed_call.11} parent=47 // pred_check
        %p1014 = pneg %p228
      $region50: #{closed_call.11} parent=47 // pred_check_branch
        %1016 = sbr.rel (%p1014) target = $region52
      $region51: #{closed_call.11} parent=47 // pred_region
        _
      $region52: #{closed_call.11} parent=47 // pred_fallthru
        _
      // Predicated region
      $region53: #{closed_call.11} parent=47 // pred_check
        %p1017 = pneg %p256
      $region54: #{closed_call.11} parent=47 // pred_check_branch
        %1019 = sbr.rel (%p1017) target = $region56
      $region55: #{closed_call.11} parent=47 // pred_region
        _
      $region56: #{closed_call.11} parent=47 // pred_fallthru
        _
    $region48: #{closed_call.11} parent=5 // pred_fallthru
      _
    %p1020 = scmp.le.s32.totalorder 2, %s15
    // Predicated region
    $region57: #{closed_call.11} parent=5 // pred_check
      %p1021 = pneg %p1020
    $region58: #{closed_call.11} parent=5 // pred_check_branch
      %1023 = sbr.rel (%p1021) target = $region60
    $region59: #{closed_call.11} parent=5 // pred_region
      %s1024 = ssub.s32 %s15, 2
      // Predicated region
      $region61: #{closed_call.11} parent=59 // pred_check
        %p1025 = pneg %p234
      $region62: #{closed_call.11} parent=59 // pred_check_branch
        %1027 = sbr.rel (%p1025) target = $region64
      $region63: #{closed_call.11} parent=59 // pred_region
        %p1028 = scmp.lt.s32.totalorder %s26, 1
        %s1029 = scalar_select %p1028, %s26, 1
        %p1030 = scmp.lt.s32.totalorder %s27, 0
        %s1031 = scalar_select %p1030, %s27, 0
        %s1032 = sadd.s32 %s1031, %s1029
        %s1033 = smul.addr %s1032, 8
        %s1034 = scalar_lea.vmem %s7, %s1033
      $region64: #{closed_call.11} parent=59 // pred_fallthru
        _
      // Predicated region
      $region65: #{closed_call.11} parent=59 // pred_check
        %p1035 = pneg %p262
      $region66: #{closed_call.11} parent=59 // pred_check_branch
        %1037 = sbr.rel (%p1035) target = $region68
      $region67: #{closed_call.11} parent=59 // pred_region
        %p1038 = scmp.lt.s32.totalorder %s26, 1
        %s1039 = scalar_select %p1038, %s26, 1
        %p1040 = scmp.lt.s32.totalorder %s27, 0
        %s1041 = scalar_select %p1040, %s27, 0
        %s1042 = smul.addr %s1039, 4
        %s1043 = sadd.s32 %s1041, %s1042
        %s1044 = smul.addr %s1043, 4
        %s1045 = scalar_lea.vmem %s8, %s1044
      $region68: #{closed_call.11} parent=59 // pred_fallthru
        _
    $region60: #{closed_call.11} parent=5 // pred_fallthru
      _
  $region6: #{closed_call.11} parent=0 // loop_footer
    %s19 = sadd.s32 1, %s15
  $region7: #{closed_call.11} parent=0 // loop_footer_branch
    %14 = sbr.rel target = $region3
  $region8: #{closed_call.11} parent=0 // loop_exit
    _

</llo_original>
